<compile_context>
chip_gen: v5e
topology: v5e:2x2
jax: 0.10.0
libtpu: 0.0.40
codegen_flags: <defaults>
</compile_context>

<pallas_src>
import jax
import jax.numpy as jnp
from jax.experimental import pallas as pl
from jax.experimental.pallas import tpu as pltpu

EPS = 1e-5  # nn.BatchNorm2d default eps


# ----------------------------- pallas_call helpers -----------------------------

def _vmem_spec():
    return pl.BlockSpec(memory_space=pltpu.MemorySpace.VMEM)


def _call(kernel, out_shape, *args):
    # Whole problem fits in VMEM at this size -> single grid point, whole-array blocks.
    return pl.pallas_call(
        kernel,
        out_shape=out_shape,
        in_specs=[_vmem_spec() for _ in args],
        out_specs=_vmem_spec(),
        compiler_params=pltpu.CompilerParams(vmem_limit_bytes=32 * 1024 * 1024),
    )(*args)


# ------------------------------ in-kernel helpers -------------------------------

def _bn_relu_rows(y, gamma, beta):
    # Train-mode BatchNorm per row (= channel) over the lane axis (M = N*H*W) + ReLU.
    # Two-pass (centered) variance; biased variance like torch's normalization.
    inv_m = 1.0 / float(y.shape[1])
    mean = jnp.sum(y, axis=1, keepdims=True) * inv_m
    yc = y - mean
    var = jnp.sum(yc * yc, axis=1, keepdims=True) * inv_m
    yn = yc * jax.lax.rsqrt(var + EPS)
    return jnp.maximum(yn * gamma + beta, 0.0)


# --------------------------------- kernels -------------------------------------

def _make_front_kernel(cl, cg, has_res):
    # Lane-dense (C, M) layout. Inputs:
    #   pT  : (9*(cl+cg), M) im2col patches of concat(x_l, x_g), tap-major rows
    #   w3T : (cl+cg, 9*(cl+cg)) fused weight; rows[:cl]=convl2l|convg2l, rows[cl:]=convl2g|0
    #   xgT : (cg, M), w1T : (ch, cg)          SpectralTransform.conv1
    #   bn  : (cl+ch, 2) packed [gamma, beta]; rows[:cl]=bn_l, rows[cl:]=st.conv1 BN
    #   resT: (cl, M) optional residual (added after ReLU; FFCResnetBlock skip)
    # Single output slab (cl+cg+ch, M):
    #   rows[:cl]=out_l, rows[cl:cl+cg]=convl2g out (pre-BN), rows[cl+cg:]=conv1 out.
    def kernel(*refs):
        if has_res:
            p_ref, w3_ref, xg_ref, w1_ref, bn_ref, res_ref, out_ref = refs
        else:
            p_ref, w3_ref, xg_ref, w1_ref, bn_ref, out_ref = refs
            res_ref = None
        bn = bn_ref[...]
        # Single fused im2col matmul: rows[:cl] = convl2l(x_l)+convg2l(x_g),
        # rows[cl:] = convl2g(x_l).  MXU N-dim = M (lane-dense).
        y3 = jnp.dot(w3_ref[...], p_ref[...], preferred_element_type=jnp.float32)
        out_l = _bn_relu_rows(y3[:cl, :], bn[:cl, 0:1], bn[:cl, 1:2])
        if res_ref is not None:
            out_l = out_l + res_ref[...]
        # SpectralTransform.conv1: 1x1 conv + BN + ReLU
        y1 = jnp.dot(w1_ref[...], xg_ref[...], preferred_element_type=jnp.float32)
        y_st = _bn_relu_rows(y1, bn[cl:, 0:1], bn[cl:, 1:2])
        out_ref[0:cl, :] = out_l
        out_ref[cl:cl + cg, :] = y3[cl:, :]
        out_ref[cl + cg:, :] = y_st
    return kernel


def _make_back_kernel(cg, has_res):
    # Inputs: czT (cg+ch, M) = [convl2g_out ; conv1_out + fourier_out] (one slab),
    #         w2T (cg, ch), bn (cg, 2) packed [gamma, beta], optional resT (cg, M).
    # out_g = relu(bn_g(convl2g_out + conv2 @ z)) [+ residual]
    def kernel(*refs):
        if has_res:
            cz_ref, w2_ref, bn_ref, res_ref, out_ref = refs
        else:
            cz_ref, w2_ref, bn_ref, out_ref = refs
            res_ref = None
        cz = cz_ref[...]
        d = jnp.dot(w2_ref[...], cz[cg:, :], preferred_element_type=jnp.float32)
        bn = bn_ref[...]
        out = _bn_relu_rows(cz[:cg, :] + d, bn[:, 0:1], bn[:, 1:2])
        if res_ref is not None:
            out = out + res_ref[...]
        out_ref[...] = out
    return kernel


# ----------------------------- wrapper-side glue ---------------------------------

def _im2col_3x3_reflect(x):
    # x: (C, N, H, W) channel-major -> (9*C, N*H*W) patches, tap-major rows
    # (row = tap*C + c_in), matching the fused-weight column ordering.  Reflect pad
    # matches torch padding_mode='reflect'.  Lives in the jitted wrapper (XLA layout
    # plumbing, not kernel compute).
    # TODO(synk): at production sizes replace HBM-side im2col (9x read amplification)
    #             with in-kernel halo row tiles + 9 shifted-view matmuls into a VMEM acc.
    C, N, H, W = x.shape
    xp = jnp.pad(x, ((0, 0), (0, 0), (1, 1), (1, 1)), mode="reflect")
    taps = [xp[:, :, ky:ky + H, kx:kx + W] for ky in range(3) for kx in range(3)]
    return jnp.stack(taps, axis=0).reshape(9 * C, N * H * W)


def ffc_bn_act(x_l, x_g, p, res_l=None, res_g=None):
    # Channel-major CNHW in/out.  One FFC_BN_ACT_global forward = 2 pallas_calls.
    cl, N, H, W = x_l.shape
    cg = x_g.shape[0]
    ch = cg // 2
    M = N * H * W
    st = p["st"]

    patches = _im2col_3x3_reflect(jnp.concatenate([x_l, x_g], axis=0))     # (9*(cl+cg), M)
    front_args = [patches, p["w3_t"], x_g.reshape(cg, M), st["conv1_w"], p["bn_front"]]
    if res_l is not None:
        front_args.append(res_l.reshape(cl, M))
    slab = _call(_make_front_kernel(cl, cg, res_l is not None),
                 jax.ShapeDtypeStruct((cl + cg + ch, M), jnp.float32),
                 *front_args)
    out_l = slab[:cl, :]
    c = slab[cl:cl + cg, :]            # convl2g(x_l), pre-BN
    y = slab[cl + cg:, :]              # SpectralTransform.conv1 output

    # ---- FourierUnit: rfft2 -> 1x1 conv + BN + ReLU -> irfft2 (ortho norm) ----
    # Plain jnp at this toy size so XLA fuses the tiny conv with the FFT epilogue.
    # TODO(synk): make this a tiled lane-dense Pallas kernel at production sizes.
    ys = y.reshape(ch, N, H, W)
    F = jnp.fft.rfft2(ys, axes=(2, 3), norm="ortho")                       # (ch, N, H, Wf)
    Wf = F.shape[-1]
    # channel layout [c0_r, c0_i, c1_r, c1_i, ...] == torch permute(0,1,4,2,3)+view;
    # fu_w must use exactly this ordering when porting real weights.
    ff = jnp.stack([jnp.real(F), jnp.imag(F)], axis=1).reshape(2 * ch, N, H, Wf)
    fo = jnp.einsum("oi,inhw->onhw", st["fu_w"], ff)
    mu = jnp.mean(fo, axis=(1, 2, 3), keepdims=True)
    var = jnp.mean(jnp.square(fo - mu), axis=(1, 2, 3), keepdims=True)
    fo = (fo - mu) * jax.lax.rsqrt(var + EPS)
    fo = fo * st["fu_bn_g"].reshape(-1, 1, 1, 1) + st["fu_bn_b"].reshape(-1, 1, 1, 1)
    fo = jnp.maximum(fo, 0.0).reshape(ch, 2, N, H, Wf)
    Fc = jax.lax.complex(fo[:, 0], fo[:, 1])
    fu = jnp.fft.irfft2(Fc, s=(H, W), axes=(2, 3), norm="ortho").astype(jnp.float32)

    cz = jnp.concatenate([c, y + fu.reshape(ch, M)], axis=0)               # (cg+ch, M)
    back_args = [cz, st["conv2_w"], p["bn_back"]]
    if res_g is not None:
        back_args.append(res_g.reshape(cg, M))
    out_g = _call(_make_back_kernel(cg, res_g is not None),
                  jax.ShapeDtypeStruct((cg, M), jnp.float32), *back_args)

    return out_l.reshape(cl, N, H, W), out_g.reshape(cg, N, H, W)


def ffc_resnet_block_cnhw(x_l, x_g, params):
    id_l, id_g = x_l, x_g
    x_l, x_g = ffc_bn_act(x_l, x_g, params["conv1"])
    # FFCResnetBlock's final (id + x) adds are folded into the second FFC_BN_ACT's kernels.
    x_l, x_g = ffc_bn_act(x_l, x_g, params["conv2"], res_l=id_l, res_g=id_g)
    return x_l, x_g


@jax.jit
def ffc_resnet_block(x_l_nchw, x_g_nchw, params):
    # Public entry point: NCHW in/out (PyTorch convention); channel-major (C, N, H, W)
    # internally so the flattened M = N*H*W axis is the lane (last) dim in every kernel.
    x_l = jnp.transpose(x_l_nchw, (1, 0, 2, 3))
    x_g = jnp.transpose(x_g_nchw, (1, 0, 2, 3))
    o_l, o_g = ffc_resnet_block_cnhw(x_l, x_g, params)
    return jnp.transpose(o_l, (1, 0, 2, 3)), jnp.transpose(o_g, (1, 0, 2, 3))


# ----------------------------- parameter init -----------------------------------

def init_ffc_bn_act_params(key, channels, ratio):
    cg = int(channels * ratio)
    cl = channels - cg
    ch = cg // 2
    ks = jax.random.split(key, 6)

    def w(k, shape, fan_in):
        return jax.random.normal(k, shape, jnp.float32) / jnp.sqrt(float(fan_in))

    # 3x3 conv weights in (ky, kx, cin, cout) layout.
    w_l2l = w(ks[0], (3, 3, cl, cl), 9 * cl)
    w_l2g = w(ks[1], (3, 3, cl, cg), 9 * cl)
    w_g2l = w(ks[2], (3, 3, cg, cl), 9 * cg)
    # Fused 3x3 weight over concat(x_l, x_g), transposed for lane-dense (Cout, M) matmuls:
    #   out rows [:cl] = convl2l(x_l) + convg2l(x_g);  rows [cl:] = convl2g(x_l).
    # TODO(synk): at production channel counts drop the (9*cg, cg) zero block (25% wasted
    #             MXU FLOPs at cl==cg) via a second matmul over x_l-only patch rows.
    w_top = jnp.concatenate([w_l2l, w_l2g], axis=-1)                        # (3,3,cl,cl+cg)
    w_bot = jnp.concatenate([w_g2l, jnp.zeros((3, 3, cg, cg), jnp.float32)], axis=-1)
    w3 = jnp.concatenate([w_top, w_bot], axis=2)                            # (3,3,cl+cg,cl+cg)
    w3_t = w3.reshape(9 * (cl + cg), cl + cg).T                             # (cl+cg, 9*(cl+cg))

    def bn_pack(n):
        return jnp.stack([jnp.ones((n,), jnp.float32), jnp.zeros((n,), jnp.float32)], axis=1)

    return {
        "w3_t": w3_t,
        "bn_front": jnp.concatenate([bn_pack(cl), bn_pack(ch)], axis=0),    # (cl+ch, 2)
        "bn_back": bn_pack(cg),                                             # (cg, 2)
        "st": {
            "conv1_w": w(ks[3], (ch, cg), cg),            # 1x1, (cout, cin)
            "fu_w": w(ks[4], (2 * ch, 2 * ch), 2 * ch),   # FourierUnit 1x1, (cout, cin)
            "fu_bn_g": jnp.ones((2 * ch,), jnp.float32),
            "fu_bn_b": jnp.zeros((2 * ch,), jnp.float32),
            "conv2_w": w(ks[5], (cg, ch), ch),            # 1x1, (cout, cin)
        },
    }


# ------------------------------------ main ---------------------------------------

if __name__ == "__main__":
    channels, ratio = 8, 0.5
    cg = int(channels * ratio)
    cl = channels - cg
    N, H, W = 2, 16, 16                      # M = N*H*W = 512 (lane axis, 128-multiple)

    key = jax.random.PRNGKey(0)
    k_xl, k_xg, k_p1, k_p2 = jax.random.split(key, 4)
    # PyTorch-style NCHW inputs: (x_l, x_g) tuple
    x_l = jax.random.normal(k_xl, (N, cl, H, W), jnp.float32)
    x_g = jax.random.normal(k_xg, (N, cg, H, W), jnp.float32)

    params = {
        "conv1": init_ffc_bn_act_params(k_p1, channels, ratio),
        "conv2": init_ffc_bn_act_params(k_p2, channels, ratio),
    }

    out_l, out_g = ffc_resnet_block(x_l, x_g, params)
    jax.block_until_ready((out_l, out_g))
    assert out_l.shape == (N, cl, H, W)
    assert out_g.shape == (N, cg, H, W)
    assert out_l.dtype == jnp.float32 and out_g.dtype == jnp.float32
    assert bool(jnp.all(jnp.isfinite(out_l))) and bool(jnp.all(jnp.isfinite(out_g)))
    print("KERNEL_OK")
</pallas_src>

<mosaic_0001>
module attributes {stable_mosaic.version = 11 : i64} {
  func.func @kernel(%arg0: memref<72x512xf32, #tpu.memory_space<vmem>>, %arg1: memref<8x72xf32, #tpu.memory_space<vmem>>, %arg2: memref<4x512xf32, #tpu.memory_space<vmem>>, %arg3: memref<2x4xf32, #tpu.memory_space<vmem>>, %arg4: memref<6x2xf32, #tpu.memory_space<vmem>>, %arg5: memref<10x512xf32, #tpu.memory_space<vmem>>) attributes {dimension_semantics = [], scalar_prefetch = 0 : i64, scratch_operands = 0 : i64, tpu.core_type = #tpu.core_type<tc>} {
    %c0 = arith.constant 0 : index
    %c0_0 = arith.constant 0 : index
    %0 = vector.load %arg4[%c0, %c0_0] : memref<6x2xf32, #tpu.memory_space<vmem>>, vector<6x2xf32>
    %c0_1 = arith.constant 0 : index
    %c0_2 = arith.constant 0 : index
    %1 = vector.load %arg1[%c0_1, %c0_2] : memref<8x72xf32, #tpu.memory_space<vmem>>, vector<8x72xf32>
    %c0_3 = arith.constant 0 : index
    %c0_4 = arith.constant 0 : index
    %2 = vector.load %arg0[%c0_3, %c0_4] : memref<72x512xf32, #tpu.memory_space<vmem>>, vector<72x512xf32>
    %cst = arith.constant dense<0.000000e+00> : vector<8x512xf32>
    %3 = tpu.matmul %1, %2, %cst {dimension_numbers = #tpu.dot_dimension_numbers<[1], [0], [0], [1], [0, 0, 1, 1], [], []>} : vector<8x72xf32>, vector<72x512xf32>, vector<8x512xf32> -> vector<8x512xf32>
    %4 = vector.extract_strided_slice %3 {offsets = [0, 0], sizes = [4, 512], strides = [1, 1]} : vector<8x512xf32> to vector<4x512xf32>
    %5 = vector.extract_strided_slice %0 {offsets = [0, 0], sizes = [4, 1], strides = [1, 1]} : vector<6x2xf32> to vector<4x1xf32>
    %6 = vector.extract_strided_slice %0 {offsets = [0, 1], sizes = [4, 1], strides = [1, 1]} : vector<6x2xf32> to vector<4x1xf32>
    %cst_5 = arith.constant dense<0.000000e+00> : vector<4xf32>
    %7 = vector.multi_reduction <add>, %4, %cst_5 [1] : vector<4x512xf32> to vector<4xf32>
    %8 = vector.shape_cast %7 : vector<4xf32> to vector<4x1xf32>
    %cst_6 = arith.constant 0.001953125 : f32
    %9 = vector.broadcast %cst_6 : f32 to vector<4x1xf32>
    %10 = arith.mulf %8, %9 : vector<4x1xf32>
    %11 = vector.broadcast %10 : vector<4x1xf32> to vector<4x512xf32>
    %12 = arith.subf %4, %11 : vector<4x512xf32>
    %13 = arith.mulf %12, %12 : vector<4x512xf32>
    %cst_7 = arith.constant dense<0.000000e+00> : vector<4xf32>
    %14 = vector.multi_reduction <add>, %13, %cst_7 [1] : vector<4x512xf32> to vector<4xf32>
    %15 = vector.shape_cast %14 : vector<4xf32> to vector<4x1xf32>
    %cst_8 = arith.constant 0.001953125 : f32
    %16 = vector.broadcast %cst_8 : f32 to vector<4x1xf32>
    %17 = arith.mulf %15, %16 : vector<4x1xf32>
    %cst_9 = arith.constant 9.99999974E-6 : f32
    %18 = vector.broadcast %cst_9 : f32 to vector<4x1xf32>
    %19 = arith.addf %17, %18 : vector<4x1xf32>
    %20 = math.rsqrt %19 : vector<4x1xf32>
    %21 = vector.broadcast %20 : vector<4x1xf32> to vector<4x512xf32>
    %22 = arith.mulf %12, %21 : vector<4x512xf32>
    %23 = vector.broadcast %5 : vector<4x1xf32> to vector<4x512xf32>
    %24 = arith.mulf %22, %23 : vector<4x512xf32>
    %25 = vector.broadcast %6 : vector<4x1xf32> to vector<4x512xf32>
    %26 = arith.addf %24, %25 : vector<4x512xf32>
    %cst_10 = arith.constant 0.000000e+00 : f32
    %27 = vector.broadcast %cst_10 : f32 to vector<4x512xf32>
    %28 = arith.maximumf %26, %27 : vector<4x512xf32>
    %c0_11 = arith.constant 0 : index
    %c0_12 = arith.constant 0 : index
    %29 = vector.load %arg3[%c0_11, %c0_12] : memref<2x4xf32, #tpu.memory_space<vmem>>, vector<2x4xf32>
    %c0_13 = arith.constant 0 : index
    %c0_14 = arith.constant 0 : index
    %30 = vector.load %arg2[%c0_13, %c0_14] : memref<4x512xf32, #tpu.memory_space<vmem>>, vector<4x512xf32>
    %cst_15 = arith.constant dense<0.000000e+00> : vector<2x512xf32>
    %31 = tpu.matmul %29, %30, %cst_15 {dimension_numbers = #tpu.dot_dimension_numbers<[1], [0], [0], [1], [0, 0, 1, 1], [], []>} : vector<2x4xf32>, vector<4x512xf32>, vector<2x512xf32> -> vector<2x512xf32>
    %32 = vector.extract_strided_slice %0 {offsets = [4, 0], sizes = [2, 1], strides = [1, 1]} : vector<6x2xf32> to vector<2x1xf32>
    %33 = vector.extract_strided_slice %0 {offsets = [4, 1], sizes = [2, 1], strides = [1, 1]} : vector<6x2xf32> to vector<2x1xf32>
    %cst_16 = arith.constant dense<0.000000e+00> : vector<2xf32>
    %34 = vector.multi_reduction <add>, %31, %cst_16 [1] : vector<2x512xf32> to vector<2xf32>
    %35 = vector.shape_cast %34 : vector<2xf32> to vector<2x1xf32>
    %cst_17 = arith.constant 0.001953125 : f32
    %36 = vector.broadcast %cst_17 : f32 to vector<2x1xf32>
    %37 = arith.mulf %35, %36 : vector<2x1xf32>
    %38 = vector.broadcast %37 : vector<2x1xf32> to vector<2x512xf32>
    %39 = arith.subf %31, %38 : vector<2x512xf32>
    %40 = arith.mulf %39, %39 : vector<2x512xf32>
    %cst_18 = arith.constant dense<0.000000e+00> : vector<2xf32>
    %41 = vector.multi_reduction <add>, %40, %cst_18 [1] : vector<2x512xf32> to vector<2xf32>
    %42 = vector.shape_cast %41 : vector<2xf32> to vector<2x1xf32>
    %cst_19 = arith.constant 0.001953125 : f32
    %43 = vector.broadcast %cst_19 : f32 to vector<2x1xf32>
    %44 = arith.mulf %42, %43 : vector<2x1xf32>
    %cst_20 = arith.constant 9.99999974E-6 : f32
    %45 = vector.broadcast %cst_20 : f32 to vector<2x1xf32>
    %46 = arith.addf %44, %45 : vector<2x1xf32>
    %47 = math.rsqrt %46 : vector<2x1xf32>
    %48 = vector.broadcast %47 : vector<2x1xf32> to vector<2x512xf32>
    %49 = arith.mulf %39, %48 : vector<2x512xf32>
    %50 = vector.broadcast %32 : vector<2x1xf32> to vector<2x512xf32>
    %51 = arith.mulf %49, %50 : vector<2x512xf32>
    %52 = vector.broadcast %33 : vector<2x1xf32> to vector<2x512xf32>
    %53 = arith.addf %51, %52 : vector<2x512xf32>
    %cst_21 = arith.constant 0.000000e+00 : f32
    %54 = vector.broadcast %cst_21 : f32 to vector<2x512xf32>
    %55 = arith.maximumf %53, %54 : vector<2x512xf32>
    %c0_22 = arith.constant 0 : index
    %c0_23 = arith.constant 0 : index
    %56 = vector.load %arg5[%c0_22, %c0_23] : memref<10x512xf32, #tpu.memory_space<vmem>>, vector<4x512xf32>
    tpu.vector_store %arg5[%c0_22, %c0_23], %28 {strides = array<i32>} : memref<10x512xf32, #tpu.memory_space<vmem>>, vector<4x512xf32>,
    %57 = vector.extract_strided_slice %3 {offsets = [4, 0], sizes = [4, 512], strides = [1, 1]} : vector<8x512xf32> to vector<4x512xf32>
    %c4 = arith.constant 4 : index
    %c0_24 = arith.constant 0 : index
    %58 = vector.load %arg5[%c4, %c0_24] : memref<10x512xf32, #tpu.memory_space<vmem>>, vector<4x512xf32>
    tpu.vector_store %arg5[%c4, %c0_24], %57 {strides = array<i32>} : memref<10x512xf32, #tpu.memory_space<vmem>>, vector<4x512xf32>,
    %c8 = arith.constant 8 : index
    %c0_25 = arith.constant 0 : index
    %59 = vector.load %arg5[%c8, %c0_25] : memref<10x512xf32, #tpu.memory_space<vmem>>, vector<2x512xf32>
    tpu.vector_store %arg5[%c8, %c0_25], %55 {strides = array<i32>} : memref<10x512xf32, #tpu.memory_space<vmem>>, vector<2x512xf32>,
    return
  }
}

module attributes {stable_mosaic.version = 11 : i64} {
  func.func @kernel(%arg0: memref<6x512xf32, #tpu.memory_space<vmem>>, %arg1: memref<4x2xf32, #tpu.memory_space<vmem>>, %arg2: memref<4x2xf32, #tpu.memory_space<vmem>>, %arg3: memref<4x512xf32, #tpu.memory_space<vmem>>) attributes {dimension_semantics = [], scalar_prefetch = 0 : i64, scratch_operands = 0 : i64, tpu.core_type = #tpu.core_type<tc>} {
    %c0 = arith.constant 0 : index
    %c0_0 = arith.constant 0 : index
    %0 = vector.load %arg0[%c0, %c0_0] : memref<6x512xf32, #tpu.memory_space<vmem>>, vector<6x512xf32>
    %c0_1 = arith.constant 0 : index
    %c0_2 = arith.constant 0 : index
    %1 = vector.load %arg1[%c0_1, %c0_2] : memref<4x2xf32, #tpu.memory_space<vmem>>, vector<4x2xf32>
    %2 = vector.extract_strided_slice %0 {offsets = [4, 0], sizes = [2, 512], strides = [1, 1]} : vector<6x512xf32> to vector<2x512xf32>
    %cst = arith.constant dense<0.000000e+00> : vector<4x512xf32>
    %3 = tpu.matmul %1, %2, %cst {dimension_numbers = #tpu.dot_dimension_numbers<[1], [0], [0], [1], [0, 0, 1, 1], [], []>} : vector<4x2xf32>, vector<2x512xf32>, vector<4x512xf32> -> vector<4x512xf32>
    %c0_3 = arith.constant 0 : index
    %c0_4 = arith.constant 0 : index
    %4 = vector.load %arg2[%c0_3, %c0_4] : memref<4x2xf32, #tpu.memory_space<vmem>>, vector<4x2xf32>
    %5 = vector.extract_strided_slice %0 {offsets = [0, 0], sizes = [4, 512], strides = [1, 1]} : vector<6x512xf32> to vector<4x512xf32>
    %6 = arith.addf %5, %3 : vector<4x512xf32>
    %7 = vector.extract_strided_slice %4 {offsets = [0, 0], sizes = [4, 1], strides = [1, 1]} : vector<4x2xf32> to vector<4x1xf32>
    %8 = vector.extract_strided_slice %4 {offsets = [0, 1], sizes = [4, 1], strides = [1, 1]} : vector<4x2xf32> to vector<4x1xf32>
    %cst_5 = arith.constant dense<0.000000e+00> : vector<4xf32>
    %9 = vector.multi_reduction <add>, %6, %cst_5 [1] : vector<4x512xf32> to vector<4xf32>
    %10 = vector.shape_cast %9 : vector<4xf32> to vector<4x1xf32>
    %cst_6 = arith.constant 0.001953125 : f32
    %11 = vector.broadcast %cst_6 : f32 to vector<4x1xf32>
    %12 = arith.mulf %10, %11 : vector<4x1xf32>
    %13 = vector.broadcast %12 : vector<4x1xf32> to vector<4x512xf32>
    %14 = arith.subf %6, %13 : vector<4x512xf32>
    %15 = arith.mulf %14, %14 : vector<4x512xf32>
    %cst_7 = arith.constant dense<0.000000e+00> : vector<4xf32>
    %16 = vector.multi_reduction <add>, %15, %cst_7 [1] : vector<4x512xf32> to vector<4xf32>
    %17 = vector.shape_cast %16 : vector<4xf32> to vector<4x1xf32>
    %cst_8 = arith.constant 0.001953125 : f32
    %18 = vector.broadcast %cst_8 : f32 to vector<4x1xf32>
    %19 = arith.mulf %17, %18 : vector<4x1xf32>
    %cst_9 = arith.constant 9.99999974E-6 : f32
    %20 = vector.broadcast %cst_9 : f32 to vector<4x1xf32>
    %21 = arith.addf %19, %20 : vector<4x1xf32>
    %22 = math.rsqrt %21 : vector<4x1xf32>
    %23 = vector.broadcast %22 : vector<4x1xf32> to vector<4x512xf32>
    %24 = arith.mulf %14, %23 : vector<4x512xf32>
    %25 = vector.broadcast %7 : vector<4x1xf32> to vector<4x512xf32>
    %26 = arith.mulf %24, %25 : vector<4x512xf32>
    %27 = vector.broadcast %8 : vector<4x1xf32> to vector<4x512xf32>
    %28 = arith.addf %26, %27 : vector<4x512xf32>
    %cst_10 = arith.constant 0.000000e+00 : f32
    %29 = vector.broadcast %cst_10 : f32 to vector<4x512xf32>
    %30 = arith.maximumf %28, %29 : vector<4x512xf32>
    %c0_11 = arith.constant 0 : index
    %c0_12 = arith.constant 0 : index
    %31 = vector.load %arg3[%c0_11, %c0_12] : memref<4x512xf32, #tpu.memory_space<vmem>>, vector<4x512xf32>
    tpu.vector_store %arg3[%c0_11, %c0_12], %30 {strides = array<i32>} : memref<4x512xf32, #tpu.memory_space<vmem>>, vector<4x512xf32>,
    return
  }
}

module attributes {stable_mosaic.version = 11 : i64} {
  func.func @kernel(%arg0: memref<72x512xf32, #tpu.memory_space<vmem>>, %arg1: memref<8x72xf32, #tpu.memory_space<vmem>>, %arg2: memref<4x512xf32, #tpu.memory_space<vmem>>, %arg3: memref<2x4xf32, #tpu.memory_space<vmem>>, %arg4: memref<6x2xf32, #tpu.memory_space<vmem>>, %arg5: memref<4x512xf32, #tpu.memory_space<vmem>>, %arg6: memref<10x512xf32, #tpu.memory_space<vmem>>) attributes {dimension_semantics = [], scalar_prefetch = 0 : i64, scratch_operands = 0 : i64, tpu.core_type = #tpu.core_type<tc>} {
    %c0 = arith.constant 0 : index
    %c0_0 = arith.constant 0 : index
    %0 = vector.load %arg4[%c0, %c0_0] : memref<6x2xf32, #tpu.memory_space<vmem>>, vector<6x2xf32>
    %c0_1 = arith.constant 0 : index
    %c0_2 = arith.constant 0 : index
    %1 = vector.load %arg1[%c0_1, %c0_2] : memref<8x72xf32, #tpu.memory_space<vmem>>, vector<8x72xf32>
    %c0_3 = arith.constant 0 : index
    %c0_4 = arith.constant 0 : index
    %2 = vector.load %arg0[%c0_3, %c0_4] : memref<72x512xf32, #tpu.memory_space<vmem>>, vector<72x512xf32>
    %cst = arith.constant dense<0.000000e+00> : vector<8x512xf32>
    %3 = tpu.matmul %1, %2, %cst {dimension_numbers = #tpu.dot_dimension_numbers<[1], [0], [0], [1], [0, 0, 1, 1], [], []>} : vector<8x72xf32>, vector<72x512xf32>, vector<8x512xf32> -> vector<8x512xf32>
    %4 = vector.extract_strided_slice %3 {offsets = [0, 0], sizes = [4, 512], strides = [1, 1]} : vector<8x512xf32> to vector<4x512xf32>
    %5 = vector.extract_strided_slice %0 {offsets = [0, 0], sizes = [4, 1], strides = [1, 1]} : vector<6x2xf32> to vector<4x1xf32>
    %6 = vector.extract_strided_slice %0 {offsets = [0, 1], sizes = [4, 1], strides = [1, 1]} : vector<6x2xf32> to vector<4x1xf32>
    %cst_5 = arith.constant dense<0.000000e+00> : vector<4xf32>
    %7 = vector.multi_reduction <add>, %4, %cst_5 [1] : vector<4x512xf32> to vector<4xf32>
    %8 = vector.shape_cast %7 : vector<4xf32> to vector<4x1xf32>
    %cst_6 = arith.constant 0.001953125 : f32
    %9 = vector.broadcast %cst_6 : f32 to vector<4x1xf32>
    %10 = arith.mulf %8, %9 : vector<4x1xf32>
    %11 = vector.broadcast %10 : vector<4x1xf32> to vector<4x512xf32>
    %12 = arith.subf %4, %11 : vector<4x512xf32>
    %13 = arith.mulf %12, %12 : vector<4x512xf32>
    %cst_7 = arith.constant dense<0.000000e+00> : vector<4xf32>
    %14 = vector.multi_reduction <add>, %13, %cst_7 [1] : vector<4x512xf32> to vector<4xf32>
    %15 = vector.shape_cast %14 : vector<4xf32> to vector<4x1xf32>
    %cst_8 = arith.constant 0.001953125 : f32
    %16 = vector.broadcast %cst_8 : f32 to vector<4x1xf32>
    %17 = arith.mulf %15, %16 : vector<4x1xf32>
    %cst_9 = arith.constant 9.99999974E-6 : f32
    %18 = vector.broadcast %cst_9 : f32 to vector<4x1xf32>
    %19 = arith.addf %17, %18 : vector<4x1xf32>
    %20 = math.rsqrt %19 : vector<4x1xf32>
    %21 = vector.broadcast %20 : vector<4x1xf32> to vector<4x512xf32>
    %22 = arith.mulf %12, %21 : vector<4x512xf32>
    %23 = vector.broadcast %5 : vector<4x1xf32> to vector<4x512xf32>
    %24 = arith.mulf %22, %23 : vector<4x512xf32>
    %25 = vector.broadcast %6 : vector<4x1xf32> to vector<4x512xf32>
    %26 = arith.addf %24, %25 : vector<4x512xf32>
    %cst_10 = arith.constant 0.000000e+00 : f32
    %27 = vector.broadcast %cst_10 : f32 to vector<4x512xf32>
    %28 = arith.maximumf %26, %27 : vector<4x512xf32>
    %c0_11 = arith.constant 0 : index
    %c0_12 = arith.constant 0 : index
    %29 = vector.load %arg5[%c0_11, %c0_12] : memref<4x512xf32, #tpu.memory_space<vmem>>, vector<4x512xf32>
    %30 = arith.addf %28, %29 : vector<4x512xf32>
    %c0_13 = arith.constant 0 : index
    %c0_14 = arith.constant 0 : index
    %31 = vector.load %arg3[%c0_13, %c0_14] : memref<2x4xf32, #tpu.memory_space<vmem>>, vector<2x4xf32>
    %c0_15 = arith.constant 0 : index
    %c0_16 = arith.constant 0 : index
    %32 = vector.load %arg2[%c0_15, %c0_16] : memref<4x512xf32, #tpu.memory_space<vmem>>, vector<4x512xf32>
    %cst_17 = arith.constant dense<0.000000e+00> : vector<2x512xf32>
    %33 = tpu.matmul %31, %32, %cst_17 {dimension_numbers = #tpu.dot_dimension_numbers<[1], [0], [0], [1], [0, 0, 1, 1], [], []>} : vector<2x4xf32>, vector<4x512xf32>, vector<2x512xf32> -> vector<2x512xf32>
    %34 = vector.extract_strided_slice %0 {offsets = [4, 0], sizes = [2, 1], strides = [1, 1]} : vector<6x2xf32> to vector<2x1xf32>
    %35 = vector.extract_strided_slice %0 {offsets = [4, 1], sizes = [2, 1], strides = [1, 1]} : vector<6x2xf32> to vector<2x1xf32>
    %cst_18 = arith.constant dense<0.000000e+00> : vector<2xf32>
    %36 = vector.multi_reduction <add>, %33, %cst_18 [1] : vector<2x512xf32> to vector<2xf32>
    %37 = vector.shape_cast %36 : vector<2xf32> to vector<2x1xf32>
    %cst_19 = arith.constant 0.001953125 : f32
    %38 = vector.broadcast %cst_19 : f32 to vector<2x1xf32>
    %39 = arith.mulf %37, %38 : vector<2x1xf32>
    %40 = vector.broadcast %39 : vector<2x1xf32> to vector<2x512xf32>
    %41 = arith.subf %33, %40 : vector<2x512xf32>
    %42 = arith.mulf %41, %41 : vector<2x512xf32>
    %cst_20 = arith.constant dense<0.000000e+00> : vector<2xf32>
    %43 = vector.multi_reduction <add>, %42, %cst_20 [1] : vector<2x512xf32> to vector<2xf32>
    %44 = vector.shape_cast %43 : vector<2xf32> to vector<2x1xf32>
    %cst_21 = arith.constant 0.001953125 : f32
    %45 = vector.broadcast %cst_21 : f32 to vector<2x1xf32>
    %46 = arith.mulf %44, %45 : vector<2x1xf32>
    %cst_22 = arith.constant 9.99999974E-6 : f32
    %47 = vector.broadcast %cst_22 : f32 to vector<2x1xf32>
    %48 = arith.addf %46, %47 : vector<2x1xf32>
    %49 = math.rsqrt %48 : vector<2x1xf32>
    %50 = vector.broadcast %49 : vector<2x1xf32> to vector<2x512xf32>
    %51 = arith.mulf %41, %50 : vector<2x512xf32>
    %52 = vector.broadcast %34 : vector<2x1xf32> to vector<2x512xf32>
    %53 = arith.mulf %51, %52 : vector<2x512xf32>
    %54 = vector.broadcast %35 : vector<2x1xf32> to vector<2x512xf32>
    %55 = arith.addf %53, %54 : vector<2x512xf32>
    %cst_23 = arith.constant 0.000000e+00 : f32
    %56 = vector.broadcast %cst_23 : f32 to vector<2x512xf32>
    %57 = arith.maximumf %55, %56 : vector<2x512xf32>
    %c0_24 = arith.constant 0 : index
    %c0_25 = arith.constant 0 : index
    %58 = vector.load %arg6[%c0_24, %c0_25] : memref<10x512xf32, #tpu.memory_space<vmem>>, vector<4x512xf32>
    tpu.vector_store %arg6[%c0_24, %c0_25], %30 {strides = array<i32>} : memref<10x512xf32, #tpu.memory_space<vmem>>, vector<4x512xf32>,
    %59 = vector.extract_strided_slice %3 {offsets = [4, 0], sizes = [4, 512], strides = [1, 1]} : vector<8x512xf32> to vector<4x512xf32>
    %c4 = arith.constant 4 : index
    %c0_26 = arith.constant 0 : index
    %60 = vector.load %arg6[%c4, %c0_26] : memref<10x512xf32, #tpu.memory_space<vmem>>, vector<4x512xf32>
    tpu.vector_store %arg6[%c4, %c0_26], %59 {strides = array<i32>} : memref<10x512xf32, #tpu.memory_space<vmem>>, vector<4x512xf32>,
    %c8 = arith.constant 8 : index
    %c0_27 = arith.constant 0 : index
    %61 = vector.load %arg6[%c8, %c0_27] : memref<10x512xf32, #tpu.memory_space<vmem>>, vector<2x512xf32>
    tpu.vector_store %arg6[%c8, %c0_27], %57 {strides = array<i32>} : memref<10x512xf32, #tpu.memory_space<vmem>>, vector<2x512xf32>,
    return
  }
}

module attributes {stable_mosaic.version = 11 : i64} {
  func.func @kernel(%arg0: memref<6x512xf32, #tpu.memory_space<vmem>>, %arg1: memref<4x2xf32, #tpu.memory_space<vmem>>, %arg2: memref<4x2xf32, #tpu.memory_space<vmem>>, %arg3: memref<4x512xf32, #tpu.memory_space<vmem>>, %arg4: memref<4x512xf32, #tpu.memory_space<vmem>>) attributes {dimension_semantics = [], scalar_prefetch = 0 : i64, scratch_operands = 0 : i64, tpu.core_type = #tpu.core_type<tc>} {
    %c0 = arith.constant 0 : index
    %c0_0 = arith.constant 0 : index
    %0 = vector.load %arg0[%c0, %c0_0] : memref<6x512xf32, #tpu.memory_space<vmem>>, vector<6x512xf32>
    %c0_1 = arith.constant 0 : index
    %c0_2 = arith.constant 0 : index
    %1 = vector.load %arg1[%c0_1, %c0_2] : memref<4x2xf32, #tpu.memory_space<vmem>>, vector<4x2xf32>
    %2 = vector.extract_strided_slice %0 {offsets = [4, 0], sizes = [2, 512], strides = [1, 1]} : vector<6x512xf32> to vector<2x512xf32>
    %cst = arith.constant dense<0.000000e+00> : vector<4x512xf32>
    %3 = tpu.matmul %1, %2, %cst {dimension_numbers = #tpu.dot_dimension_numbers<[1], [0], [0], [1], [0, 0, 1, 1], [], []>} : vector<4x2xf32>, vector<2x512xf32>, vector<4x512xf32> -> vector<4x512xf32>
    %c0_3 = arith.constant 0 : index
    %c0_4 = arith.constant 0 : index
    %4 = vector.load %arg2[%c0_3, %c0_4] : memref<4x2xf32, #tpu.memory_space<vmem>>, vector<4x2xf32>
    %5 = vector.extract_strided_slice %0 {offsets = [0, 0], sizes = [4, 512], strides = [1, 1]} : vector<6x512xf32> to vector<4x512xf32>
    %6 = arith.addf %5, %3 : vector<4x512xf32>
    %7 = vector.extract_strided_slice %4 {offsets = [0, 0], sizes = [4, 1], strides = [1, 1]} : vector<4x2xf32> to vector<4x1xf32>
    %8 = vector.extract_strided_slice %4 {offsets = [0, 1], sizes = [4, 1], strides = [1, 1]} : vector<4x2xf32> to vector<4x1xf32>
    %cst_5 = arith.constant dense<0.000000e+00> : vector<4xf32>
    %9 = vector.multi_reduction <add>, %6, %cst_5 [1] : vector<4x512xf32> to vector<4xf32>
    %10 = vector.shape_cast %9 : vector<4xf32> to vector<4x1xf32>
    %cst_6 = arith.constant 0.001953125 : f32
    %11 = vector.broadcast %cst_6 : f32 to vector<4x1xf32>
    %12 = arith.mulf %10, %11 : vector<4x1xf32>
    %13 = vector.broadcast %12 : vector<4x1xf32> to vector<4x512xf32>
    %14 = arith.subf %6, %13 : vector<4x512xf32>
    %15 = arith.mulf %14, %14 : vector<4x512xf32>
    %cst_7 = arith.constant dense<0.000000e+00> : vector<4xf32>
    %16 = vector.multi_reduction <add>, %15, %cst_7 [1] : vector<4x512xf32> to vector<4xf32>
    %17 = vector.shape_cast %16 : vector<4xf32> to vector<4x1xf32>
    %cst_8 = arith.constant 0.001953125 : f32
    %18 = vector.broadcast %cst_8 : f32 to vector<4x1xf32>
    %19 = arith.mulf %17, %18 : vector<4x1xf32>
    %cst_9 = arith.constant 9.99999974E-6 : f32
    %20 = vector.broadcast %cst_9 : f32 to vector<4x1xf32>
    %21 = arith.addf %19, %20 : vector<4x1xf32>
    %22 = math.rsqrt %21 : vector<4x1xf32>
    %23 = vector.broadcast %22 : vector<4x1xf32> to vector<4x512xf32>
    %24 = arith.mulf %14, %23 : vector<4x512xf32>
    %25 = vector.broadcast %7 : vector<4x1xf32> to vector<4x512xf32>
    %26 = arith.mulf %24, %25 : vector<4x512xf32>
    %27 = vector.broadcast %8 : vector<4x1xf32> to vector<4x512xf32>
    %28 = arith.addf %26, %27 : vector<4x512xf32>
    %cst_10 = arith.constant 0.000000e+00 : f32
    %29 = vector.broadcast %cst_10 : f32 to vector<4x512xf32>
    %30 = arith.maximumf %28, %29 : vector<4x512xf32>
    %c0_11 = arith.constant 0 : index
    %c0_12 = arith.constant 0 : index
    %31 = vector.load %arg3[%c0_11, %c0_12] : memref<4x512xf32, #tpu.memory_space<vmem>>, vector<4x512xf32>
    %32 = arith.addf %30, %31 : vector<4x512xf32>
    %c0_13 = arith.constant 0 : index
    %c0_14 = arith.constant 0 : index
    %33 = vector.load %arg4[%c0_13, %c0_14] : memref<4x512xf32, #tpu.memory_space<vmem>>, vector<4x512xf32>
    tpu.vector_store %arg4[%c0_13, %c0_14], %32 {strides = array<i32>} : memref<4x512xf32, #tpu.memory_space<vmem>>, vector<4x512xf32>,
    return
  }
}

</mosaic_0001>

<llo_original>
// kernel: ffc_resnet_block.4
$region0: #{ffc_resnet_block.4}
  #allocation0 [shape = 'u32[]', space=smem, size = 0x4, offset = 0x4, fixed_abs, tag = 'smem constant byte address 0x4 - core index']
  #allocation1 [shape = 'u32[72,128]{1,0:T(1,128)}', space=vmem, size = 0x9000, scoped, tag = 'internal scratch']
  %s0 = inlined_call_operand.vmem [shape: f32[72,512], index: 0, kind: input, shape index: {}]
  %s1 = inlined_call_operand.vmem [shape: f32[8,72], index: 1, kind: input, shape index: {}]
  %s2 = inlined_call_operand.vmem [shape: f32[4,512], index: 2, kind: input, shape index: {}]
  %s3 = inlined_call_operand.vmem [shape: f32[2,4], index: 3, kind: input, shape index: {}]
  %s4 = inlined_call_operand.vmem [shape: f32[6,2], index: 4, kind: input, shape index: {}]
  %s5 = inlined_call_operand.vmem [shape: f32[10,512], index: 5, kind: output, shape index: {}]
  %s6 = sld [smem:[#allocation0]]
  $region30: #{ffc_resnet_block.4} parent=0
    _
  %s8 = ssub.s32 1, %s6
  %s9 = scalar_select 0, %s8, %s6
  // Predicated region
  $region2: #{ffc_resnet_block.4} parent=0 // pred_check
    _
  $region3: #{ffc_resnet_block.4} parent=0 // pred_check_branch
    %11 = sbr.rel (0) target = $region5
  $region4: #{ffc_resnet_block.4} parent=0 // pred_region
    _
  $region5: #{ffc_resnet_block.4} parent=0 // pred_fallthru
    _
  // Predicated region
  $region6: #{ffc_resnet_block.4} parent=0 // pred_check
    _
  $region7: #{ffc_resnet_block.4} parent=0 // pred_check_branch
    %13 = sbr.rel (0) target = $region9
  $region8: #{ffc_resnet_block.4} parent=0 // pred_region
    _
  $region9: #{ffc_resnet_block.4} parent=0 // pred_fallthru
    _
  // Predicated region
  $region10: #{ffc_resnet_block.4} parent=0 // pred_check
    _
  $region11: #{ffc_resnet_block.4} parent=0 // pred_check_branch
    %15 = sbr.rel (0) target = $region13
  $region12: #{ffc_resnet_block.4} parent=0 // pred_region
    _
  $region13: #{ffc_resnet_block.4} parent=0 // pred_fallthru
    _
  // Predicated region
  $region14: #{ffc_resnet_block.4} parent=0 // pred_check
    _
  $region15: #{ffc_resnet_block.4} parent=0 // pred_check_branch
    %17 = sbr.rel (0) target = $region17
  $region16: #{ffc_resnet_block.4} parent=0 // pred_region
    _
  $region17: #{ffc_resnet_block.4} parent=0 // pred_fallthru
    _
  // Predicated region
  $region18: #{ffc_resnet_block.4} parent=0 // pred_check
    _
  $region19: #{ffc_resnet_block.4} parent=0 // pred_check_branch
    %19 = sbr.rel (0) target = $region21
  $region20: #{ffc_resnet_block.4} parent=0 // pred_region
    _
  $region21: #{ffc_resnet_block.4} parent=0 // pred_fallthru
    _
  %v20 = vld [vmem:[%s4] sm:$0x3f]
  %v21 = vld [vmem:[%s1] sm:$0xff]
  %v22 = vld [vmem:[%s0] sm:$0xff]
  %v23 = vld [vmem:[%s0 + $0x8] sm:$0xff]
  %v24 = vld [vmem:[%s0 + $0x10] sm:$0xff]
  %v25 = vld [vmem:[%s0 + $0x18] sm:$0xff]
  %v26 = vld [vmem:[%s0 + $0x20] sm:$0xff]
  %v27 = vld [vmem:[%s0 + $0x28] sm:$0xff]
  %v28 = vld [vmem:[%s0 + $0x30] sm:$0xff]
  %v29 = vld [vmem:[%s0 + $0x38] sm:$0xff]
  %v30 = vld [vmem:[%s0 + $0x40] sm:$0xff]
  %v31 = vld [vmem:[%s0 + $0x48] sm:$0xff]
  %v32 = vld [vmem:[%s0 + $0x50] sm:$0xff]
  %v33 = vld [vmem:[%s0 + $0x58] sm:$0xff]
  %v34 = vld [vmem:[%s0 + $0x60] sm:$0xff]
  %v35 = vld [vmem:[%s0 + $0x68] sm:$0xff]
  %v36 = vld [vmem:[%s0 + $0x70] sm:$0xff]
  %v37 = vld [vmem:[%s0 + $0x78] sm:$0xff]
  %v38 = vld [vmem:[%s0 + $0x80] sm:$0xff]
  %v39 = vld [vmem:[%s0 + $0x88] sm:$0xff]
  %v40 = vld [vmem:[%s0 + $0x90] sm:$0xff]
  %v41 = vld [vmem:[%s0 + $0x98] sm:$0xff]
  %v42 = vld [vmem:[%s0 + $0xa0] sm:$0xff]
  %v43 = vld [vmem:[%s0 + $0xa8] sm:$0xff]
  %v44 = vld [vmem:[%s0 + $0xb0] sm:$0xff]
  %v45 = vld [vmem:[%s0 + $0xb8] sm:$0xff]
  %v46 = vld [vmem:[%s0 + $0xc0] sm:$0xff]
  %v47 = vld [vmem:[%s0 + $0xc8] sm:$0xff]
  %v48 = vld [vmem:[%s0 + $0xd0] sm:$0xff]
  %v49 = vld [vmem:[%s0 + $0xd8] sm:$0xff]
  %v50 = vld [vmem:[%s0 + $0xe0] sm:$0xff]
  %v51 = vld [vmem:[%s0 + $0xe8] sm:$0xff]
  %v52 = vld [vmem:[%s0 + $0xf0] sm:$0xff]
  %v53 = vld [vmem:[%s0 + $0xf8] sm:$0xff]
  %v54 = vld [vmem:[%s0 + $0x100] sm:$0xff]
  %v55 = vld [vmem:[%s0 + $0x108] sm:$0xff]
  %v56 = vld [vmem:[%s0 + $0x110] sm:$0xff]
  %v57 = vld [vmem:[%s0 + $0x118] sm:$0xff]
  %vm58 = vcmask 588800
  %v60 = vsel %vm58, %v21, 0
  %62 = vmatpush.msra.mxu0 0.0
  %63 = vmatpush.msra.mxu0 0.0
  %64 = vmatpush.msra.mxu0 0.0
  %65 = vmatpush.msra.mxu0 0.0
  %66 = vmatpush.msra.mxu0 0.0
  %67 = vmatpush.msra.mxu0 0.0
  %68 = vmatpush.msra.mxu0 0.0
  %69 = vmatpush.msra.mxu0 %v54
  %70 = vmatpush.msra.mxu0 %v50
  %71 = vmatpush.msra.mxu0 %v46
  %72 = vmatpush.msra.mxu0 %v42
  %73 = vmatpush.msra.mxu0 %v38
  %74 = vmatpush.msra.mxu0 %v34
  %75 = vmatpush.msra.mxu0 %v30
  %76 = vmatpush.msra.mxu0 %v26
  %77 = vmatpush.msra.mxu0 %v22
  %78 = vmatmul.f32.gmra.mxu0 %v60
  %v79 = vpop.f32.mrf.mxu0
  %v80 = vadd.f32 0.0, %v79
  %81 = vdwg.mxu0
  %82 = vmatpush.msra.mxu0 0.0
  %83 = vmatpush.msra.mxu0 0.0
  %84 = vmatpush.msra.mxu0 0.0
  %85 = vmatpush.msra.mxu0 0.0
  %86 = vmatpush.msra.mxu0 0.0
  %87 = vmatpush.msra.mxu0 0.0
  %88 = vmatpush.msra.mxu0 0.0
  %89 = vmatpush.msra.mxu0 %v55
  %90 = vmatpush.msra.mxu0 %v51
  %91 = vmatpush.msra.mxu0 %v47
  %92 = vmatpush.msra.mxu0 %v43
  %93 = vmatpush.msra.mxu0 %v39
  %94 = vmatpush.msra.mxu0 %v35
  %95 = vmatpush.msra.mxu0 %v31
  %96 = vmatpush.msra.mxu0 %v27
  %97 = vmatpush.msra.mxu0 %v23
  %98 = vmatmul.f32.gmra.mxu0 %v60
  %v99 = vpop.f32.mrf.mxu0
  %v100 = vadd.f32 0.0, %v99
  %101 = vdwg.mxu0
  %102 = vmatpush.msra.mxu0 0.0
  %103 = vmatpush.msra.mxu0 0.0
  %104 = vmatpush.msra.mxu0 0.0
  %105 = vmatpush.msra.mxu0 0.0
  %106 = vmatpush.msra.mxu0 0.0
  %107 = vmatpush.msra.mxu0 0.0
  %108 = vmatpush.msra.mxu0 0.0
  %109 = vmatpush.msra.mxu0 %v56
  %110 = vmatpush.msra.mxu0 %v52
  %111 = vmatpush.msra.mxu0 %v48
  %112 = vmatpush.msra.mxu0 %v44
  %113 = vmatpush.msra.mxu0 %v40
  %114 = vmatpush.msra.mxu0 %v36
  %115 = vmatpush.msra.mxu0 %v32
  %116 = vmatpush.msra.mxu0 %v28
  %117 = vmatpush.msra.mxu0 %v24
  %118 = vmatmul.f32.gmra.mxu0 %v60
  %v119 = vpop.f32.mrf.mxu0
  %v120 = vadd.f32 0.0, %v119
  %121 = vdwg.mxu0
  %122 = vmatpush.msra.mxu0 0.0
  %123 = vmatpush.msra.mxu0 0.0
  %124 = vmatpush.msra.mxu0 0.0
  %125 = vmatpush.msra.mxu0 0.0
  %126 = vmatpush.msra.mxu0 0.0
  %127 = vmatpush.msra.mxu0 0.0
  %128 = vmatpush.msra.mxu0 0.0
  %129 = vmatpush.msra.mxu0 %v57
  %130 = vmatpush.msra.mxu0 %v53
  %131 = vmatpush.msra.mxu0 %v49
  %132 = vmatpush.msra.mxu0 %v45
  %133 = vmatpush.msra.mxu0 %v41
  %134 = vmatpush.msra.mxu0 %v37
  %135 = vmatpush.msra.mxu0 %v33
  %136 = vmatpush.msra.mxu0 %v29
  %137 = vmatpush.msra.mxu0 %v25
  %138 = vmatmul.f32.gmra.mxu0 %v60
  %v139 = vpop.f32.mrf.mxu0
  %v140 = vadd.f32 0.0, %v139
  %141 = vdwg.mxu0
  %vm142 = vcmask 1043456
  %v143 = vsel %vm142, %v80, 0.0
  %v144 = vsel %vm142, %v100, 0.0
  %v145 = vadd.f32 %v143, %v144
  %v146 = vsel %vm142, %v120, 0.0
  %v147 = vadd.f32 %v145, %v146
  %v148 = vsel %vm142, %v140, 0.0
  %v149 = vadd.f32 %v147, %v148
  %150 = vadd.xlane.f32.xlu0 %v149
  %v151 = vpop.xlane.xlu0 %150
  %v152 = vmul.f32 %v151, 0.001953125
  %v153 = vsub.f32 %v80, %v152
  %v154 = vsub.f32 %v100, %v152
  %v155 = vsub.f32 %v120, %v152
  %v156 = vsub.f32 %v140, %v152
  %v157 = vmul.f32 %v153, %v153
  %v158 = vmul.f32 %v154, %v154
  %v159 = vmul.f32 %v155, %v155
  %v160 = vmul.f32 %v156, %v156
  %v161 = vsel %vm142, %v157, 0.0
  %v162 = vsel %vm142, %v158, 0.0
  %v163 = vadd.f32 %v161, %v162
  %v164 = vsel %vm142, %v159, 0.0
  %v165 = vadd.f32 %v163, %v164
  %v166 = vsel %vm142, %v160, 0.0
  %v167 = vadd.f32 %v165, %v166
  %168 = vadd.xlane.f32.xlu0 %v167
  %v169 = vpop.xlane.xlu0 %168
  %v170 = vmul.f32 %v169, 0.001953125
  %v171 = vadd.f32 %v170, 1e-05
  %v172 = vrsqrt.pop %v171
  %v173 = vmul.f32 %v172, %v171
  %v174 = vmul.f32 %v173, %v172
  %v175 = vmul.f32 0.5, %v174
  %v176 = vsub.f32 1.5, %v175
  %v177 = vmul.f32 %v172, %v176
  %vm178 = vweird.f32 %v171
  %vm179 = vweird.f32 %v172
  %vm180 = vmor %vm178, %vm179
  %v181 = vsel %vm180, %v172, %v177
  %v182 = vmul.f32 %v153, %v181
  %v183 = vmul.f32 %v154, %v181
  %v184 = vmul.f32 %v155, %v181
  %v185 = vmul.f32 %v156, %v181
  %187 = vset.pattern.permute.xlu0 0
  %188 = vperm.xlu0 %187, %v20
  %v189 = vpop.permute.xlu0 %188
  %v191 = vmul.f32 %v182, %v189
  %v192 = vmul.f32 %v183, %v189
  %v193 = vmul.f32 %v184, %v189
  %v194 = vmul.f32 %v185, %v189
  %195 = vset.pattern.permute.xlu0 1
  %196 = vperm.xlu0 %195, %v20
  %v197 = vpop.permute.xlu0 %196
  %v199 = vadd.f32 %v191, %v197
  %v200 = vadd.f32 %v192, %v197
  %v201 = vadd.f32 %v193, %v197
  %v202 = vadd.f32 %v194, %v197
  %v203 = vmax.f32 %v199, 0.0
  %v204 = vmax.f32 %v200, 0.0
  %v205 = vmax.f32 %v201, 0.0
  %v206 = vmax.f32 %v202, 0.0
  %v207 = vld [vmem:[%s3] sm:$0x3]
  %v208 = vld [vmem:[%s2] sm:$0xff]
  %v209 = vld [vmem:[%s2 + $0x8] sm:$0xff]
  %212 = vst [vmem:[#allocation1] ss:$2 sm:$0xff] %v208
  %s213 = scalar_lea.vmem [#allocation1], 16
  %214 = vst [vmem:[%s213] ss:$2 sm:$0xff] %v209
  %v215 = vld.sshfl [vmem:[#allocation1] sm:$0xff pattern:$0x75316420]
  %v216 = vld.sshfl [vmem:[#allocation1 + $0x8] sm:$0xff pattern:$0x75316420]
  %v217 = vld.sshfl [vmem:[#allocation1 + $0x10] sm:$0xff pattern:$0x75316420]
  %v218 = vld.sshfl [vmem:[#allocation1 + $0x18] sm:$0xff pattern:$0x75316420]
  %vm219 = vcmask 31744
  %v221 = vsel %vm219, %v207, 0
  %v223 = vsel %vm142, %v215, 0
  %v225 = vsel %vm142, %v216, 0
  %v227 = vsel %vm142, %v217, 0
  %v229 = vsel %vm142, %v218, 0
  %231 = vmatpush.msra.mxu0 0.0
  %232 = vmatpush.msra.mxu0 0.0
  %233 = vmatpush.msra.mxu0 0.0
  %234 = vmatpush.msra.mxu0 0.0
  %235 = vmatpush.msra.mxu0 0.0
  %236 = vmatpush.msra.mxu0 0.0
  %237 = vmatpush.msra.mxu0 0.0
  %238 = vmatpush.msra.mxu0 0.0
  %239 = vmatpush.msra.mxu0 0.0
  %240 = vmatpush.msra.mxu0 0.0
  %241 = vmatpush.msra.mxu0 0.0
  %242 = vmatpush.msra.mxu0 0.0
  %243 = vmatpush.msra.mxu0 0.0
  %244 = vmatpush.msra.mxu0 0.0
  %245 = vmatpush.msra.mxu0 0.0
  %246 = vmatpush.msra.mxu0 %v223
  %247 = vmatmul.f32.gmra.mxu0 %v221
  %v248 = vpop.f32.mrf.mxu0
  %v249 = vadd.f32 0.0, %v248
  %250 = vdwg.mxu0
  %251 = vmatpush.msra.mxu0 0.0
  %252 = vmatpush.msra.mxu0 0.0
  %253 = vmatpush.msra.mxu0 0.0
  %254 = vmatpush.msra.mxu0 0.0
  %255 = vmatpush.msra.mxu0 0.0
  %256 = vmatpush.msra.mxu0 0.0
  %257 = vmatpush.msra.mxu0 0.0
  %258 = vmatpush.msra.mxu0 0.0
  %259 = vmatpush.msra.mxu0 0.0
  %260 = vmatpush.msra.mxu0 0.0
  %261 = vmatpush.msra.mxu0 0.0
  %262 = vmatpush.msra.mxu0 0.0
  %263 = vmatpush.msra.mxu0 0.0
  %264 = vmatpush.msra.mxu0 0.0
  %265 = vmatpush.msra.mxu0 0.0
  %266 = vmatpush.msra.mxu0 %v225
  %267 = vmatmul.f32.gmra.mxu0 %v221
  %v268 = vpop.f32.mrf.mxu0
  %v269 = vadd.f32 0.0, %v268
  %270 = vdwg.mxu0
  %271 = vmatpush.msra.mxu0 0.0
  %272 = vmatpush.msra.mxu0 0.0
  %273 = vmatpush.msra.mxu0 0.0
  %274 = vmatpush.msra.mxu0 0.0
  %275 = vmatpush.msra.mxu0 0.0
  %276 = vmatpush.msra.mxu0 0.0
  %277 = vmatpush.msra.mxu0 0.0
  %278 = vmatpush.msra.mxu0 0.0
  %279 = vmatpush.msra.mxu0 0.0
  %280 = vmatpush.msra.mxu0 0.0
  %281 = vmatpush.msra.mxu0 0.0
  %282 = vmatpush.msra.mxu0 0.0
  %283 = vmatpush.msra.mxu0 0.0
  %284 = vmatpush.msra.mxu0 0.0
  %285 = vmatpush.msra.mxu0 0.0
  %286 = vmatpush.msra.mxu0 %v227
  %287 = vmatmul.f32.gmra.mxu0 %v221
  %v288 = vpop.f32.mrf.mxu0
  %v289 = vadd.f32 0.0, %v288
  %290 = vdwg.mxu0
  %291 = vmatpush.msra.mxu0 0.0
  %292 = vmatpush.msra.mxu0 0.0
  %293 = vmatpush.msra.mxu0 0.0
  %294 = vmatpush.msra.mxu0 0.0
  %295 = vmatpush.msra.mxu0 0.0
  %296 = vmatpush.msra.mxu0 0.0
  %297 = vmatpush.msra.mxu0 0.0
  %298 = vmatpush.msra.mxu0 0.0
  %299 = vmatpush.msra.mxu0 0.0
  %300 = vmatpush.msra.mxu0 0.0
  %301 = vmatpush.msra.mxu0 0.0
  %302 = vmatpush.msra.mxu0 0.0
  %303 = vmatpush.msra.mxu0 0.0
  %304 = vmatpush.msra.mxu0 0.0
  %305 = vmatpush.msra.mxu0 0.0
  %306 = vmatpush.msra.mxu0 %v229
  %307 = vmatmul.f32.gmra.mxu0 %v221
  %v308 = vpop.f32.mrf.mxu0
  %v309 = vadd.f32 0.0, %v308
  %310 = vdwg.mxu0
  %vm311 = vcmask 1041408
  %v312 = vsel %vm311, %v249, 0.0
  %v313 = vsel %vm311, %v269, 0.0
  %v314 = vadd.f32 %v312, %v313
  %v315 = vsel %vm311, %v289, 0.0
  %v316 = vadd.f32 %v314, %v315
  %v317 = vsel %vm311, %v309, 0.0
  %v318 = vadd.f32 %v316, %v317
  %319 = vadd.xlane.f32.xlu0 %v318
  %v320 = vpop.xlane.xlu0 %319
  %v321 = vmul.f32 %v320, 0.001953125
  %v322 = vsub.f32 %v249, %v321
  %v323 = vsub.f32 %v269, %v321
  %v324 = vsub.f32 %v289, %v321
  %v325 = vsub.f32 %v309, %v321
  %v326 = vmul.f32 %v322, %v322
  %v327 = vmul.f32 %v323, %v323
  %v328 = vmul.f32 %v324, %v324
  %v329 = vmul.f32 %v325, %v325
  %v330 = vsel %vm311, %v326, 0.0
  %v331 = vsel %vm311, %v327, 0.0
  %v332 = vadd.f32 %v330, %v331
  %v333 = vsel %vm311, %v328, 0.0
  %v334 = vadd.f32 %v332, %v333
  %v335 = vsel %vm311, %v329, 0.0
  %v336 = vadd.f32 %v334, %v335
  %337 = vadd.xlane.f32.xlu0 %v336
  %v338 = vpop.xlane.xlu0 %337
  %v339 = vmul.f32 %v338, 0.001953125
  %v340 = vadd.f32 %v339, 1e-05
  %v341 = vrsqrt.pop %v340
  %v342 = vmul.f32 %v341, %v340
  %v343 = vmul.f32 %v342, %v341
  %v344 = vmul.f32 0.5, %v343
  %v345 = vsub.f32 1.5, %v344
  %v346 = vmul.f32 %v341, %v345
  %vm347 = vweird.f32 %v340
  %vm348 = vweird.f32 %v341
  %vm349 = vmor %vm347, %vm348
  %v350 = vsel %vm349, %v341, %v346
  %v351 = vmul.f32 %v322, %v350
  %v352 = vmul.f32 %v323, %v350
  %v353 = vmul.f32 %v324, %v350
  %v354 = vmul.f32 %v325, %v350
  %v355 = vrot.slane %v189, 4
  %v357 = vmul.f32 %v351, %v355
  %v358 = vmul.f32 %v352, %v355
  %v359 = vmul.f32 %v353, %v355
  %v360 = vmul.f32 %v354, %v355
  %v361 = vrot.slane %v197, 4
  %v363 = vadd.f32 %v357, %v361
  %v364 = vadd.f32 %v358, %v361
  %v365 = vadd.f32 %v359, %v361
  %v366 = vadd.f32 %v360, %v361
  %v367 = vmax.f32 %v363, 0.0
  %v368 = vmax.f32 %v364, 0.0
  %v369 = vmax.f32 %v365, 0.0
  %v370 = vmax.f32 %v366, 0.0
  %371 = vst [vmem:[%s5] sm:$0xf] %v203
  %372 = vst [vmem:[%s5 + $0x8] sm:$0xf] %v204
  %373 = vst [vmem:[%s5 + $0x10] sm:$0xf] %v205
  %374 = vst [vmem:[%s5 + $0x18] sm:$0xf] %v206
  %375 = vst [vmem:[%s5] sm:$0xf0] %v80
  %376 = vst [vmem:[%s5 + $0x8] sm:$0xf0] %v100
  %377 = vst [vmem:[%s5 + $0x10] sm:$0xf0] %v120
  %378 = vst [vmem:[%s5 + $0x18] sm:$0xf0] %v140
  %379 = vst [vmem:[%s5 + $0x20] sm:$0x3] %v367
  %380 = vst [vmem:[%s5 + $0x28] sm:$0x3] %v368
  %381 = vst [vmem:[%s5 + $0x30] sm:$0x3] %v369
  %382 = vst [vmem:[%s5 + $0x38] sm:$0x3] %v370
  // Predicated region
  $region22: #{ffc_resnet_block.4} parent=0 // pred_check
    _
  $region23: #{ffc_resnet_block.4} parent=0 // pred_check_branch
    %384 = sbr.rel (0) target = $region25
  $region24: #{ffc_resnet_block.4} parent=0 // pred_region
    _
  $region25: #{ffc_resnet_block.4} parent=0 // pred_fallthru
    _
  // Predicated region
  $region26: #{ffc_resnet_block.4} parent=0 // pred_check
    _
  $region27: #{ffc_resnet_block.4} parent=0 // pred_check_branch
    %386 = sbr.rel (0) target = $region29
  $region28: #{ffc_resnet_block.4} parent=0 // pred_region
    _
  $region29: #{ffc_resnet_block.4} parent=0 // pred_fallthru
    _

// kernel: reverse.5
$region0: #{reverse.5}
  %s0 = inlined_call_operand.vmem [shape: f32[2,2,16,7], index: 0, kind: input, shape index: {}]
  %s1 = inlined_call_operand.vmem [shape: f32[2,2,16,7], index: 1, kind: output, shape index: {}]
  $region1: #{reverse.5} parent=0
    #allocation0 [shape = 'u8[32768]{0}', space=vmem, size = 0x8000, scoped, tag = 'operand span for operand 0']
    #allocation1 [shape = 'u8[16384]{0}', space=vmem, size = 0x4000, scoped, tag = 'operand span for operand 1']
    %s2 = scalar_lea.vmem [#allocation0], 8
    // Predicated region
    $region2: #{reverse.5} parent=1 // pred_check
      _
    $region3: #{reverse.5} parent=1 // pred_check_branch
      %4 = sbr.rel (0) target = $region5
    $region4: #{reverse.5} parent=1 // pred_region
      // Predicated region
      $region6: #{reverse.5} parent=4 // pred_check
        _
      $region7: #{reverse.5} parent=4 // pred_check_branch
        %6 = sbr.rel (0) target = $region9
      $region8: #{reverse.5} parent=4 // pred_region
        // Predicated region
        $region21: #{reverse.5} parent=8 // pred_check
          _
        $region22: #{reverse.5} parent=8 // pred_check_branch
          %28 = sbr.rel (0) target = $region24
        $region23: #{reverse.5} parent=8 // pred_region
          loop: start=0, step=1, limit=1
          $region25: #{reverse.5} parent=23 // loop_pre_header
            _
          $region26: #{reverse.5} parent=23 // loop_header
            %s30 = sphi 0, %s34
            %p31 = scmp.ge.s32.totalorder %s30, 1
            %s35 = sphi %s0, %s0
            %s36 = sphi %s2, %s2
          $region27: #{reverse.5} parent=23 // loop_header_branch
            %33 = sbr.rel (%p31) target = $region31
          $region28: #{reverse.5} parent=23 // loop_body
            %v37 = vld [vmem:[%s35] sm:$0xff]
            %38 = vst [vmem:[%s36] sm:$0xff] %v37
            %v39 = vld [vmem:[%s35 + $0x8] sm:$0xff]
            %40 = vst [vmem:[%s36 + $0x10] sm:$0xff] %v39
            %v41 = vld [vmem:[%s35 + $0x10] sm:$0xff]
            %42 = vst [vmem:[%s36 + $0x20] sm:$0xff] %v41
            %v43 = vld [vmem:[%s35 + $0x18] sm:$0xff]
            %44 = vst [vmem:[%s36 + $0x30] sm:$0xff] %v43
          $region29: #{reverse.5} parent=23 // loop_footer
            %s34 = sadd.s32 1, %s30
          $region30: #{reverse.5} parent=23 // loop_footer_branch
            %29 = sbr.rel target = $region26
          $region31: #{reverse.5} parent=23 // loop_exit
            _
        $region24: #{reverse.5} parent=8 // pred_fallthru
          _
        // Predicated region
        $region32: #{reverse.5} parent=8 // pred_check
          _
        $region33: #{reverse.5} parent=8 // pred_check_branch
          %46 = sbr.rel target = $region35
        $region34: #{reverse.5} parent=8 // pred_region
          _
        $region35: #{reverse.5} parent=8 // pred_fallthru
          _
      $region9: #{reverse.5} parent=4 // pred_fallthru
        _
      // Predicated region
      $region10: #{reverse.5} parent=4 // pred_check
        _
      $region11: #{reverse.5} parent=4 // pred_check_branch
        %8 = sbr.rel target = $region13
      $region12: #{reverse.5} parent=4 // pred_region
        %s10 = ssub.s32 256, 1
        loop: start=0, step=1, limit=1
        $region14: #{reverse.5} parent=12 // loop_pre_header
          _
        $region15: #{reverse.5} parent=12 // loop_header
          %s12 = sphi 0, %s16
          %p13 = scmp.ge.s32.totalorder %s12, 1
          %s17 = sphi %s0, %s0
          %s18 = sphi %s2, %s2
        $region16: #{reverse.5} parent=12 // loop_header_branch
          %15 = sbr.rel (%p13) target = $region20
        $region17: #{reverse.5} parent=12 // loop_body
          %v19 = vld [vmem:[%s17] sm:%s10]
          %20 = vst [vmem:[%s18] sm:%s10] %v19
          %v21 = vld [vmem:[%s17 + $0x8] sm:%s10]
          %22 = vst [vmem:[%s18 + $0x10] sm:%s10] %v21
          %v23 = vld [vmem:[%s17 + $0x10] sm:%s10]
          %24 = vst [vmem:[%s18 + $0x20] sm:%s10] %v23
          %v25 = vld [vmem:[%s17 + $0x18] sm:%s10]
          %26 = vst [vmem:[%s18 + $0x30] sm:%s10] %v25
        $region18: #{reverse.5} parent=12 // loop_footer
          %s16 = sadd.s32 1, %s12
        $region19: #{reverse.5} parent=12 // loop_footer_branch
          %11 = sbr.rel target = $region15
        $region20: #{reverse.5} parent=12 // loop_exit
          _
      $region13: #{reverse.5} parent=4 // pred_fallthru
        _
    $region5: #{reverse.5} parent=1 // pred_fallthru
      _
    %47 = vnop
    %s48 = scalar_lea.vmem [#allocation0], 7
    %v49 = vld [vmem:[%s48] ss:$-1 sm:$0xff]
    %v50 = vrot.slane %v49, 1
    %51 = vst [vmem:[#allocation1] sm:$0xff] %v50
    %s52 = scalar_lea.vmem [#allocation0], 8
    %s53 = scalar_lea.vmem %s52, 7 [#allocation0]
    %v54 = vld [vmem:[%s53] ss:$-1 sm:$0xff]
    %v55 = vrot.slane %v54, 1
    %v56 = vlaneseq
    %v57 = vshrl.u32 %v56, 7
    %vm58 = vcmp.lt.s32.totalorder %v57, 7
    %59 = vst.msk [vmem:[#allocation1] sm:$0xff] %vm58, %v55
    %s60 = scalar_lea.vmem [#allocation1], 8
    %s61 = scalar_lea.vmem [#allocation0], 16
    %s62 = scalar_lea.vmem %s61, 7 [#allocation0]
    %v63 = vld [vmem:[%s62] ss:$-1 sm:$0xff]
    %v64 = vrot.slane %v63, 1
    %65 = vst [vmem:[%s60] sm:$0xff] %v64
    %s66 = scalar_lea.vmem %s61, 8 [#allocation0]
    %s67 = scalar_lea.vmem %s66, 7 [#allocation0]
    %v68 = vld [vmem:[%s67] ss:$-1 sm:$0xff]
    %v69 = vrot.slane %v68, 1
    %v70 = vlaneseq
    %v71 = vshrl.u32 %v70, 7
    %vm72 = vcmp.lt.s32.totalorder %v71, 7
    %73 = vst.msk [vmem:[%s60] sm:$0xff] %vm72, %v69
    %s74 = scalar_lea.vmem [#allocation1], 16
    %s75 = scalar_lea.vmem [#allocation0], 32
    %s76 = scalar_lea.vmem %s75, 7 [#allocation0]
    %v77 = vld [vmem:[%s76] ss:$-1 sm:$0xff]
    %v78 = vrot.slane %v77, 1
    %79 = vst [vmem:[%s74] sm:$0xff] %v78
    %s80 = scalar_lea.vmem %s75, 8 [#allocation0]
    %s81 = scalar_lea.vmem %s80, 7 [#allocation0]
    %v82 = vld [vmem:[%s81] ss:$-1 sm:$0xff]
    %v83 = vrot.slane %v82, 1
    %v84 = vlaneseq
    %v85 = vshrl.u32 %v84, 7
    %vm86 = vcmp.lt.s32.totalorder %v85, 7
    %87 = vst.msk [vmem:[%s74] sm:$0xff] %vm86, %v83
    %s88 = scalar_lea.vmem [#allocation1], 24
    %s89 = scalar_lea.vmem [#allocation0], 48
    %s90 = scalar_lea.vmem %s89, 7 [#allocation0]
    %v91 = vld [vmem:[%s90] ss:$-1 sm:$0xff]
    %v92 = vrot.slane %v91, 1
    %93 = vst [vmem:[%s88] sm:$0xff] %v92
    %s94 = scalar_lea.vmem %s89, 8 [#allocation0]
    %s95 = scalar_lea.vmem %s94, 7 [#allocation0]
    %v96 = vld [vmem:[%s95] ss:$-1 sm:$0xff]
    %v97 = vrot.slane %v96, 1
    %v98 = vlaneseq
    %v99 = vshrl.u32 %v98, 7
    %vm100 = vcmp.lt.s32.totalorder %v99, 7
    %101 = vst.msk [vmem:[%s88] sm:$0xff] %vm100, %v97
    // Predicated region
    $region36: #{reverse.5} parent=1 // pred_check
      _
    $region37: #{reverse.5} parent=1 // pred_check_branch
      %103 = sbr.rel (0) target = $region39
    $region38: #{reverse.5} parent=1 // pred_region
      // Predicated region
      $region40: #{reverse.5} parent=38 // pred_check
        _
      $region41: #{reverse.5} parent=38 // pred_check_branch
        %105 = sbr.rel (0) target = $region43
      $region42: #{reverse.5} parent=38 // pred_region
        // Predicated region
        $region55: #{reverse.5} parent=42 // pred_check
          _
        $region56: #{reverse.5} parent=42 // pred_check_branch
          %127 = sbr.rel (0) target = $region58
        $region57: #{reverse.5} parent=42 // pred_region
          loop: start=0, step=1, limit=1
          $region59: #{reverse.5} parent=57 // loop_pre_header
            _
          $region60: #{reverse.5} parent=57 // loop_header
            %s129 = sphi 0, %s133
            %p130 = scmp.ge.s32.totalorder %s129, 1
            %s134 = sphi [#allocation1], [#allocation1]
            %s135 = sphi %s1, %s1
          $region61: #{reverse.5} parent=57 // loop_header_branch
            %132 = sbr.rel (%p130) target = $region65
          $region62: #{reverse.5} parent=57 // loop_body
            %v136 = vld [vmem:[%s134] sm:$0xff]
            %137 = vst [vmem:[%s135] sm:$0xff] %v136
            %v138 = vld [vmem:[%s134 + $0x8] sm:$0xff]
            %139 = vst [vmem:[%s135 + $0x8] sm:$0xff] %v138
            %v140 = vld [vmem:[%s134 + $0x10] sm:$0xff]
            %141 = vst [vmem:[%s135 + $0x10] sm:$0xff] %v140
            %v142 = vld [vmem:[%s134 + $0x18] sm:$0xff]
            %143 = vst [vmem:[%s135 + $0x18] sm:$0xff] %v142
          $region63: #{reverse.5} parent=57 // loop_footer
            %s133 = sadd.s32 1, %s129
          $region64: #{reverse.5} parent=57 // loop_footer_branch
            %128 = sbr.rel target = $region60
          $region65: #{reverse.5} parent=57 // loop_exit
            _
        $region58: #{reverse.5} parent=42 // pred_fallthru
          _
        // Predicated region
        $region66: #{reverse.5} parent=42 // pred_check
          _
        $region67: #{reverse.5} parent=42 // pred_check_branch
          %145 = sbr.rel target = $region69
        $region68: #{reverse.5} parent=42 // pred_region
          _
        $region69: #{reverse.5} parent=42 // pred_fallthru
          _
      $region43: #{reverse.5} parent=38 // pred_fallthru
        _
      // Predicated region
      $region44: #{reverse.5} parent=38 // pred_check
        _
      $region45: #{reverse.5} parent=38 // pred_check_branch
        %107 = sbr.rel target = $region47
      $region46: #{reverse.5} parent=38 // pred_region
        %s109 = ssub.s32 256, 1
        loop: start=0, step=1, limit=1
        $region48: #{reverse.5} parent=46 // loop_pre_header
          _
        $region49: #{reverse.5} parent=46 // loop_header
          %s111 = sphi 0, %s115
          %p112 = scmp.ge.s32.totalorder %s111, 1
          %s116 = sphi [#allocation1], [#allocation1]
          %s117 = sphi %s1, %s1
        $region50: #{reverse.5} parent=46 // loop_header_branch
          %114 = sbr.rel (%p112) target = $region54
        $region51: #{reverse.5} parent=46 // loop_body
          %v118 = vld [vmem:[%s116] sm:%s109]
          %119 = vst [vmem:[%s117] sm:%s109] %v118
          %v120 = vld [vmem:[%s116 + $0x8] sm:%s109]
          %121 = vst [vmem:[%s117 + $0x8] sm:%s109] %v120
          %v122 = vld [vmem:[%s116 + $0x10] sm:%s109]
          %123 = vst [vmem:[%s117 + $0x10] sm:%s109] %v122
          %v124 = vld [vmem:[%s116 + $0x18] sm:%s109]
          %125 = vst [vmem:[%s117 + $0x18] sm:%s109] %v124
        $region52: #{reverse.5} parent=46 // loop_footer
          %s115 = sadd.s32 1, %s111
        $region53: #{reverse.5} parent=46 // loop_footer_branch
          %110 = sbr.rel target = $region49
        $region54: #{reverse.5} parent=46 // loop_exit
          _
      $region47: #{reverse.5} parent=38 // pred_fallthru
        _
    $region39: #{reverse.5} parent=1 // pred_fallthru
      _
    %146 = vnop

// kernel: ffc_resnet_block.5
$region0: #{ffc_resnet_block.5}
  #allocation0 [shape = 'u32[]', space=smem, size = 0x4, offset = 0x4, fixed_abs, tag = 'smem constant byte address 0x4 - core index']
  #allocation1 [shape = 'u32[72,128]{1,0:T(1,128)}', space=vmem, size = 0x9000, scoped, tag = 'internal scratch']
  %s0 = inlined_call_operand.vmem [shape: f32[6,512], index: 0, kind: input, shape index: {}]
  %s1 = inlined_call_operand.vmem [shape: f32[4,2], index: 1, kind: input, shape index: {}]
  %s2 = inlined_call_operand.vmem [shape: f32[4,2], index: 2, kind: input, shape index: {}]
  %s3 = inlined_call_operand.vmem [shape: f32[4,512], index: 3, kind: output, shape index: {}]
  %s4 = sld [smem:[#allocation0]]
  $region22: #{ffc_resnet_block.5} parent=0
    _
  %s6 = ssub.s32 1, %s4
  %s7 = scalar_select 0, %s6, %s4
  // Predicated region
  $region2: #{ffc_resnet_block.5} parent=0 // pred_check
    _
  $region3: #{ffc_resnet_block.5} parent=0 // pred_check_branch
    %9 = sbr.rel (0) target = $region5
  $region4: #{ffc_resnet_block.5} parent=0 // pred_region
    _
  $region5: #{ffc_resnet_block.5} parent=0 // pred_fallthru
    _
  // Predicated region
  $region6: #{ffc_resnet_block.5} parent=0 // pred_check
    _
  $region7: #{ffc_resnet_block.5} parent=0 // pred_check_branch
    %11 = sbr.rel (0) target = $region9
  $region8: #{ffc_resnet_block.5} parent=0 // pred_region
    _
  $region9: #{ffc_resnet_block.5} parent=0 // pred_fallthru
    _
  // Predicated region
  $region10: #{ffc_resnet_block.5} parent=0 // pred_check
    _
  $region11: #{ffc_resnet_block.5} parent=0 // pred_check_branch
    %13 = sbr.rel (0) target = $region13
  $region12: #{ffc_resnet_block.5} parent=0 // pred_region
    _
  $region13: #{ffc_resnet_block.5} parent=0 // pred_fallthru
    _
  %v14 = vld [vmem:[%s0] sm:$0x3f]
  %v15 = vld [vmem:[%s0 + $0x8] sm:$0x3f]
  %v16 = vld [vmem:[%s0 + $0x10] sm:$0x3f]
  %v17 = vld [vmem:[%s0 + $0x18] sm:$0x3f]
  %v18 = vld [vmem:[%s1] sm:$0xf]
  %v23 = vrot.slane %v14, 4
  %v24 = vrot.slane %v15, 4
  %v25 = vrot.slane %v16, 4
  %v26 = vrot.slane %v17, 4
  %vm27 = vcmask 15360
  %v29 = vsel %vm27, %v18, 0
  %vm31 = vcmask 1041408
  %v32 = vsel %vm31, %v23, 0
  %v34 = vsel %vm31, %v24, 0
  %v36 = vsel %vm31, %v25, 0
  %v38 = vsel %vm31, %v26, 0
  %40 = vmatpush.msra.mxu0 0.0
  %41 = vmatpush.msra.mxu0 0.0
  %42 = vmatpush.msra.mxu0 0.0
  %43 = vmatpush.msra.mxu0 0.0
  %44 = vmatpush.msra.mxu0 0.0
  %45 = vmatpush.msra.mxu0 0.0
  %46 = vmatpush.msra.mxu0 0.0
  %47 = vmatpush.msra.mxu0 0.0
  %48 = vmatpush.msra.mxu0 0.0
  %49 = vmatpush.msra.mxu0 0.0
  %50 = vmatpush.msra.mxu0 0.0
  %51 = vmatpush.msra.mxu0 0.0
  %52 = vmatpush.msra.mxu0 0.0
  %53 = vmatpush.msra.mxu0 0.0
  %54 = vmatpush.msra.mxu0 0.0
  %55 = vmatpush.msra.mxu0 %v32
  %56 = vmatmul.f32.gmra.mxu0 %v29
  %v57 = vpop.f32.mrf.mxu0
  %v58 = vadd.f32 0.0, %v57
  %59 = vdwg.mxu0
  %60 = vmatpush.msra.mxu0 0.0
  %61 = vmatpush.msra.mxu0 0.0
  %62 = vmatpush.msra.mxu0 0.0
  %63 = vmatpush.msra.mxu0 0.0
  %64 = vmatpush.msra.mxu0 0.0
  %65 = vmatpush.msra.mxu0 0.0
  %66 = vmatpush.msra.mxu0 0.0
  %67 = vmatpush.msra.mxu0 0.0
  %68 = vmatpush.msra.mxu0 0.0
  %69 = vmatpush.msra.mxu0 0.0
  %70 = vmatpush.msra.mxu0 0.0
  %71 = vmatpush.msra.mxu0 0.0
  %72 = vmatpush.msra.mxu0 0.0
  %73 = vmatpush.msra.mxu0 0.0
  %74 = vmatpush.msra.mxu0 0.0
  %75 = vmatpush.msra.mxu0 %v34
  %76 = vmatmul.f32.gmra.mxu0 %v29
  %v77 = vpop.f32.mrf.mxu0
  %v78 = vadd.f32 0.0, %v77
  %79 = vdwg.mxu0
  %80 = vmatpush.msra.mxu0 0.0
  %81 = vmatpush.msra.mxu0 0.0
  %82 = vmatpush.msra.mxu0 0.0
  %83 = vmatpush.msra.mxu0 0.0
  %84 = vmatpush.msra.mxu0 0.0
  %85 = vmatpush.msra.mxu0 0.0
  %86 = vmatpush.msra.mxu0 0.0
  %87 = vmatpush.msra.mxu0 0.0
  %88 = vmatpush.msra.mxu0 0.0
  %89 = vmatpush.msra.mxu0 0.0
  %90 = vmatpush.msra.mxu0 0.0
  %91 = vmatpush.msra.mxu0 0.0
  %92 = vmatpush.msra.mxu0 0.0
  %93 = vmatpush.msra.mxu0 0.0
  %94 = vmatpush.msra.mxu0 0.0
  %95 = vmatpush.msra.mxu0 %v36
  %96 = vmatmul.f32.gmra.mxu0 %v29
  %v97 = vpop.f32.mrf.mxu0
  %v98 = vadd.f32 0.0, %v97
  %99 = vdwg.mxu0
  %100 = vmatpush.msra.mxu0 0.0
  %101 = vmatpush.msra.mxu0 0.0
  %102 = vmatpush.msra.mxu0 0.0
  %103 = vmatpush.msra.mxu0 0.0
  %104 = vmatpush.msra.mxu0 0.0
  %105 = vmatpush.msra.mxu0 0.0
  %106 = vmatpush.msra.mxu0 0.0
  %107 = vmatpush.msra.mxu0 0.0
  %108 = vmatpush.msra.mxu0 0.0
  %109 = vmatpush.msra.mxu0 0.0
  %110 = vmatpush.msra.mxu0 0.0
  %111 = vmatpush.msra.mxu0 0.0
  %112 = vmatpush.msra.mxu0 0.0
  %113 = vmatpush.msra.mxu0 0.0
  %114 = vmatpush.msra.mxu0 0.0
  %115 = vmatpush.msra.mxu0 %v38
  %116 = vmatmul.f32.gmra.mxu0 %v29
  %v117 = vpop.f32.mrf.mxu0
  %v118 = vadd.f32 0.0, %v117
  %119 = vdwg.mxu0
  %v120 = vld [vmem:[%s2] sm:$0xf]
  %v121 = vadd.f32 %v14, %v58
  %v122 = vadd.f32 %v15, %v78
  %v123 = vadd.f32 %v16, %v98
  %v124 = vadd.f32 %v17, %v118
  %vm125 = vcmask 1043456
  %v126 = vsel %vm125, %v121, 0.0
  %v127 = vsel %vm125, %v122, 0.0
  %v128 = vadd.f32 %v126, %v127
  %v129 = vsel %vm125, %v123, 0.0
  %v130 = vadd.f32 %v128, %v129
  %v131 = vsel %vm125, %v124, 0.0
  %v132 = vadd.f32 %v130, %v131
  %133 = vadd.xlane.f32.xlu0 %v132
  %v134 = vpop.xlane.xlu0 %133
  %v135 = vmul.f32 %v134, 0.001953125
  %v136 = vsub.f32 %v121, %v135
  %v137 = vsub.f32 %v122, %v135
  %v138 = vsub.f32 %v123, %v135
  %v139 = vsub.f32 %v124, %v135
  %v140 = vmul.f32 %v136, %v136
  %v141 = vmul.f32 %v137, %v137
  %v142 = vmul.f32 %v138, %v138
  %v143 = vmul.f32 %v139, %v139
  %v144 = vsel %vm125, %v140, 0.0
  %v145 = vsel %vm125, %v141, 0.0
  %v146 = vadd.f32 %v144, %v145
  %v147 = vsel %vm125, %v142, 0.0
  %v148 = vadd.f32 %v146, %v147
  %v149 = vsel %vm125, %v143, 0.0
  %v150 = vadd.f32 %v148, %v149
  %151 = vadd.xlane.f32.xlu0 %v150
  %v152 = vpop.xlane.xlu0 %151
  %v153 = vmul.f32 %v152, 0.001953125
  %v154 = vadd.f32 %v153, 1e-05
  %v155 = vrsqrt.pop %v154
  %v156 = vmul.f32 %v155, %v154
  %v157 = vmul.f32 %v156, %v155
  %v158 = vmul.f32 0.5, %v157
  %v159 = vsub.f32 1.5, %v158
  %v160 = vmul.f32 %v155, %v159
  %vm161 = vweird.f32 %v154
  %vm162 = vweird.f32 %v155
  %vm163 = vmor %vm161, %vm162
  %v164 = vsel %vm163, %v155, %v160
  %v165 = vmul.f32 %v136, %v164
  %v166 = vmul.f32 %v137, %v164
  %v167 = vmul.f32 %v138, %v164
  %v168 = vmul.f32 %v139, %v164
  %170 = vset.pattern.permute.xlu0 0
  %171 = vperm.xlu0 %170, %v120
  %v172 = vpop.permute.xlu0 %171
  %v174 = vmul.f32 %v165, %v172
  %v175 = vmul.f32 %v166, %v172
  %v176 = vmul.f32 %v167, %v172
  %v177 = vmul.f32 %v168, %v172
  %178 = vset.pattern.permute.xlu0 1
  %179 = vperm.xlu0 %178, %v120
  %v180 = vpop.permute.xlu0 %179
  %v182 = vadd.f32 %v174, %v180
  %v183 = vadd.f32 %v175, %v180
  %v184 = vadd.f32 %v176, %v180
  %v185 = vadd.f32 %v177, %v180
  %v186 = vmax.f32 %v182, 0.0
  %v187 = vmax.f32 %v183, 0.0
  %v188 = vmax.f32 %v184, 0.0
  %v189 = vmax.f32 %v185, 0.0
  %v194 = vrot.slane %v187, 4
  %v195 = vrot.slane %v189, 4
  %v196 = vsel %vm125, %v186, %v194
  %v197 = vsel %vm125, %v188, %v195
  %200 = vst [vmem:[%s3] sm:$0xff] %v196
  %201 = vst [vmem:[%s3 + $0x8] sm:$0xff] %v197
  // Predicated region
  $region14: #{ffc_resnet_block.5} parent=0 // pred_check
    _
  $region15: #{ffc_resnet_block.5} parent=0 // pred_check_branch
    %203 = sbr.rel (0) target = $region17
  $region16: #{ffc_resnet_block.5} parent=0 // pred_region
    _
  $region17: #{ffc_resnet_block.5} parent=0 // pred_fallthru
    _
  // Predicated region
  $region18: #{ffc_resnet_block.5} parent=0 // pred_check
    _
  $region19: #{ffc_resnet_block.5} parent=0 // pred_check_branch
    %205 = sbr.rel (0) target = $region21
  $region20: #{ffc_resnet_block.5} parent=0 // pred_region
    _
  $region21: #{ffc_resnet_block.5} parent=0 // pred_fallthru
    _

// kernel: ffc_resnet_block.6
$region0: #{ffc_resnet_block.6}
  #allocation0 [shape = 'u32[]', space=smem, size = 0x4, offset = 0x4, fixed_abs, tag = 'smem constant byte address 0x4 - core index']
  #allocation1 [shape = 'u32[72,128]{1,0:T(1,128)}', space=vmem, size = 0x9000, scoped, tag = 'internal scratch']
  %s0 = inlined_call_operand.vmem [shape: f32[72,512], index: 0, kind: input, shape index: {}]
  %s1 = inlined_call_operand.vmem [shape: f32[8,72], index: 1, kind: input, shape index: {}]
  %s2 = inlined_call_operand.vmem [shape: f32[4,512], index: 2, kind: input, shape index: {}]
  %s3 = inlined_call_operand.vmem [shape: f32[2,4], index: 3, kind: input, shape index: {}]
  %s4 = inlined_call_operand.vmem [shape: f32[6,2], index: 4, kind: input, shape index: {}]
  %s5 = inlined_call_operand.vmem [shape: f32[4,512], index: 5, kind: input, shape index: {}]
  %s6 = inlined_call_operand.vmem [shape: f32[10,512], index: 6, kind: output, shape index: {}]
  %s7 = sld [smem:[#allocation0]]
  $region34: #{ffc_resnet_block.6} parent=0
    _
  %s9 = ssub.s32 1, %s7
  %s10 = scalar_select 0, %s9, %s7
  // Predicated region
  $region2: #{ffc_resnet_block.6} parent=0 // pred_check
    _
  $region3: #{ffc_resnet_block.6} parent=0 // pred_check_branch
    %12 = sbr.rel (0) target = $region5
  $region4: #{ffc_resnet_block.6} parent=0 // pred_region
    _
  $region5: #{ffc_resnet_block.6} parent=0 // pred_fallthru
    _
  // Predicated region
  $region6: #{ffc_resnet_block.6} parent=0 // pred_check
    _
  $region7: #{ffc_resnet_block.6} parent=0 // pred_check_branch
    %14 = sbr.rel (0) target = $region9
  $region8: #{ffc_resnet_block.6} parent=0 // pred_region
    _
  $region9: #{ffc_resnet_block.6} parent=0 // pred_fallthru
    _
  // Predicated region
  $region10: #{ffc_resnet_block.6} parent=0 // pred_check
    _
  $region11: #{ffc_resnet_block.6} parent=0 // pred_check_branch
    %16 = sbr.rel (0) target = $region13
  $region12: #{ffc_resnet_block.6} parent=0 // pred_region
    _
  $region13: #{ffc_resnet_block.6} parent=0 // pred_fallthru
    _
  // Predicated region
  $region14: #{ffc_resnet_block.6} parent=0 // pred_check
    _
  $region15: #{ffc_resnet_block.6} parent=0 // pred_check_branch
    %18 = sbr.rel (0) target = $region17
  $region16: #{ffc_resnet_block.6} parent=0 // pred_region
    _
  $region17: #{ffc_resnet_block.6} parent=0 // pred_fallthru
    _
  // Predicated region
  $region18: #{ffc_resnet_block.6} parent=0 // pred_check
    _
  $region19: #{ffc_resnet_block.6} parent=0 // pred_check_branch
    %20 = sbr.rel (0) target = $region21
  $region20: #{ffc_resnet_block.6} parent=0 // pred_region
    _
  $region21: #{ffc_resnet_block.6} parent=0 // pred_fallthru
    _
  // Predicated region
  $region22: #{ffc_resnet_block.6} parent=0 // pred_check
    _
  $region23: #{ffc_resnet_block.6} parent=0 // pred_check_branch
    %22 = sbr.rel (0) target = $region25
  $region24: #{ffc_resnet_block.6} parent=0 // pred_region
    _
  $region25: #{ffc_resnet_block.6} parent=0 // pred_fallthru
    _
  %v23 = vld [vmem:[%s4] sm:$0x3f]
  %v24 = vld [vmem:[%s1] sm:$0xff]
  %v25 = vld [vmem:[%s0] sm:$0xff]
  %v26 = vld [vmem:[%s0 + $0x8] sm:$0xff]
  %v27 = vld [vmem:[%s0 + $0x10] sm:$0xff]
  %v28 = vld [vmem:[%s0 + $0x18] sm:$0xff]
  %v29 = vld [vmem:[%s0 + $0x20] sm:$0xff]
  %v30 = vld [vmem:[%s0 + $0x28] sm:$0xff]
  %v31 = vld [vmem:[%s0 + $0x30] sm:$0xff]
  %v32 = vld [vmem:[%s0 + $0x38] sm:$0xff]
  %v33 = vld [vmem:[%s0 + $0x40] sm:$0xff]
  %v34 = vld [vmem:[%s0 + $0x48] sm:$0xff]
  %v35 = vld [vmem:[%s0 + $0x50] sm:$0xff]
  %v36 = vld [vmem:[%s0 + $0x58] sm:$0xff]
  %v37 = vld [vmem:[%s0 + $0x60] sm:$0xff]
  %v38 = vld [vmem:[%s0 + $0x68] sm:$0xff]
  %v39 = vld [vmem:[%s0 + $0x70] sm:$0xff]
  %v40 = vld [vmem:[%s0 + $0x78] sm:$0xff]
  %v41 = vld [vmem:[%s0 + $0x80] sm:$0xff]
  %v42 = vld [vmem:[%s0 + $0x88] sm:$0xff]
  %v43 = vld [vmem:[%s0 + $0x90] sm:$0xff]
  %v44 = vld [vmem:[%s0 + $0x98] sm:$0xff]
  %v45 = vld [vmem:[%s0 + $0xa0] sm:$0xff]
  %v46 = vld [vmem:[%s0 + $0xa8] sm:$0xff]
  %v47 = vld [vmem:[%s0 + $0xb0] sm:$0xff]
  %v48 = vld [vmem:[%s0 + $0xb8] sm:$0xff]
  %v49 = vld [vmem:[%s0 + $0xc0] sm:$0xff]
  %v50 = vld [vmem:[%s0 + $0xc8] sm:$0xff]
  %v51 = vld [vmem:[%s0 + $0xd0] sm:$0xff]
  %v52 = vld [vmem:[%s0 + $0xd8] sm:$0xff]
  %v53 = vld [vmem:[%s0 + $0xe0] sm:$0xff]
  %v54 = vld [vmem:[%s0 + $0xe8] sm:$0xff]
  %v55 = vld [vmem:[%s0 + $0xf0] sm:$0xff]
  %v56 = vld [vmem:[%s0 + $0xf8] sm:$0xff]
  %v57 = vld [vmem:[%s0 + $0x100] sm:$0xff]
  %v58 = vld [vmem:[%s0 + $0x108] sm:$0xff]
  %v59 = vld [vmem:[%s0 + $0x110] sm:$0xff]
  %v60 = vld [vmem:[%s0 + $0x118] sm:$0xff]
  %vm61 = vcmask 588800
  %v63 = vsel %vm61, %v24, 0
  %65 = vmatpush.msra.mxu0 0.0
  %66 = vmatpush.msra.mxu0 0.0
  %67 = vmatpush.msra.mxu0 0.0
  %68 = vmatpush.msra.mxu0 0.0
  %69 = vmatpush.msra.mxu0 0.0
  %70 = vmatpush.msra.mxu0 0.0
  %71 = vmatpush.msra.mxu0 0.0
  %72 = vmatpush.msra.mxu0 %v57
  %73 = vmatpush.msra.mxu0 %v53
  %74 = vmatpush.msra.mxu0 %v49
  %75 = vmatpush.msra.mxu0 %v45
  %76 = vmatpush.msra.mxu0 %v41
  %77 = vmatpush.msra.mxu0 %v37
  %78 = vmatpush.msra.mxu0 %v33
  %79 = vmatpush.msra.mxu0 %v29
  %80 = vmatpush.msra.mxu0 %v25
  %81 = vmatmul.f32.gmra.mxu0 %v63
  %v82 = vpop.f32.mrf.mxu0
  %v83 = vadd.f32 0.0, %v82
  %84 = vdwg.mxu0
  %85 = vmatpush.msra.mxu0 0.0
  %86 = vmatpush.msra.mxu0 0.0
  %87 = vmatpush.msra.mxu0 0.0
  %88 = vmatpush.msra.mxu0 0.0
  %89 = vmatpush.msra.mxu0 0.0
  %90 = vmatpush.msra.mxu0 0.0
  %91 = vmatpush.msra.mxu0 0.0
  %92 = vmatpush.msra.mxu0 %v58
  %93 = vmatpush.msra.mxu0 %v54
  %94 = vmatpush.msra.mxu0 %v50
  %95 = vmatpush.msra.mxu0 %v46
  %96 = vmatpush.msra.mxu0 %v42
  %97 = vmatpush.msra.mxu0 %v38
  %98 = vmatpush.msra.mxu0 %v34
  %99 = vmatpush.msra.mxu0 %v30
  %100 = vmatpush.msra.mxu0 %v26
  %101 = vmatmul.f32.gmra.mxu0 %v63
  %v102 = vpop.f32.mrf.mxu0
  %v103 = vadd.f32 0.0, %v102
  %104 = vdwg.mxu0
  %105 = vmatpush.msra.mxu0 0.0
  %106 = vmatpush.msra.mxu0 0.0
  %107 = vmatpush.msra.mxu0 0.0
  %108 = vmatpush.msra.mxu0 0.0
  %109 = vmatpush.msra.mxu0 0.0
  %110 = vmatpush.msra.mxu0 0.0
  %111 = vmatpush.msra.mxu0 0.0
  %112 = vmatpush.msra.mxu0 %v59
  %113 = vmatpush.msra.mxu0 %v55
  %114 = vmatpush.msra.mxu0 %v51
  %115 = vmatpush.msra.mxu0 %v47
  %116 = vmatpush.msra.mxu0 %v43
  %117 = vmatpush.msra.mxu0 %v39
  %118 = vmatpush.msra.mxu0 %v35
  %119 = vmatpush.msra.mxu0 %v31
  %120 = vmatpush.msra.mxu0 %v27
  %121 = vmatmul.f32.gmra.mxu0 %v63
  %v122 = vpop.f32.mrf.mxu0
  %v123 = vadd.f32 0.0, %v122
  %124 = vdwg.mxu0
  %125 = vmatpush.msra.mxu0 0.0
  %126 = vmatpush.msra.mxu0 0.0
  %127 = vmatpush.msra.mxu0 0.0
  %128 = vmatpush.msra.mxu0 0.0
  %129 = vmatpush.msra.mxu0 0.0
  %130 = vmatpush.msra.mxu0 0.0
  %131 = vmatpush.msra.mxu0 0.0
  %132 = vmatpush.msra.mxu0 %v60
  %133 = vmatpush.msra.mxu0 %v56
  %134 = vmatpush.msra.mxu0 %v52
  %135 = vmatpush.msra.mxu0 %v48
  %136 = vmatpush.msra.mxu0 %v44
  %137 = vmatpush.msra.mxu0 %v40
  %138 = vmatpush.msra.mxu0 %v36
  %139 = vmatpush.msra.mxu0 %v32
  %140 = vmatpush.msra.mxu0 %v28
  %141 = vmatmul.f32.gmra.mxu0 %v63
  %v142 = vpop.f32.mrf.mxu0
  %v143 = vadd.f32 0.0, %v142
  %144 = vdwg.mxu0
  %vm145 = vcmask 1043456
  %v146 = vsel %vm145, %v83, 0.0
  %v147 = vsel %vm145, %v103, 0.0
  %v148 = vadd.f32 %v146, %v147
  %v149 = vsel %vm145, %v123, 0.0
  %v150 = vadd.f32 %v148, %v149
  %v151 = vsel %vm145, %v143, 0.0
  %v152 = vadd.f32 %v150, %v151
  %153 = vadd.xlane.f32.xlu0 %v152
  %v154 = vpop.xlane.xlu0 %153
  %v155 = vmul.f32 %v154, 0.001953125
  %v156 = vsub.f32 %v83, %v155
  %v157 = vsub.f32 %v103, %v155
  %v158 = vsub.f32 %v123, %v155
  %v159 = vsub.f32 %v143, %v155
  %v160 = vmul.f32 %v156, %v156
  %v161 = vmul.f32 %v157, %v157
  %v162 = vmul.f32 %v158, %v158
  %v163 = vmul.f32 %v159, %v159
  %v164 = vsel %vm145, %v160, 0.0
  %v165 = vsel %vm145, %v161, 0.0
  %v166 = vadd.f32 %v164, %v165
  %v167 = vsel %vm145, %v162, 0.0
  %v168 = vadd.f32 %v166, %v167
  %v169 = vsel %vm145, %v163, 0.0
  %v170 = vadd.f32 %v168, %v169
  %171 = vadd.xlane.f32.xlu0 %v170
  %v172 = vpop.xlane.xlu0 %171
  %v173 = vmul.f32 %v172, 0.001953125
  %v174 = vadd.f32 %v173, 1e-05
  %v175 = vrsqrt.pop %v174
  %v176 = vmul.f32 %v175, %v174
  %v177 = vmul.f32 %v176, %v175
  %v178 = vmul.f32 0.5, %v177
  %v179 = vsub.f32 1.5, %v178
  %v180 = vmul.f32 %v175, %v179
  %vm181 = vweird.f32 %v174
  %vm182 = vweird.f32 %v175
  %vm183 = vmor %vm181, %vm182
  %v184 = vsel %vm183, %v175, %v180
  %v185 = vmul.f32 %v156, %v184
  %v186 = vmul.f32 %v157, %v184
  %v187 = vmul.f32 %v158, %v184
  %v188 = vmul.f32 %v159, %v184
  %190 = vset.pattern.permute.xlu0 0
  %191 = vperm.xlu0 %190, %v23
  %v192 = vpop.permute.xlu0 %191
  %v194 = vmul.f32 %v185, %v192
  %v195 = vmul.f32 %v186, %v192
  %v196 = vmul.f32 %v187, %v192
  %v197 = vmul.f32 %v188, %v192
  %198 = vset.pattern.permute.xlu0 1
  %199 = vperm.xlu0 %198, %v23
  %v200 = vpop.permute.xlu0 %199
  %v202 = vadd.f32 %v194, %v200
  %v203 = vadd.f32 %v195, %v200
  %v204 = vadd.f32 %v196, %v200
  %v205 = vadd.f32 %v197, %v200
  %v206 = vmax.f32 %v202, 0.0
  %v207 = vmax.f32 %v203, 0.0
  %v208 = vmax.f32 %v204, 0.0
  %v209 = vmax.f32 %v205, 0.0
  %v210 = vld [vmem:[%s5] sm:$0xff]
  %v211 = vld [vmem:[%s5 + $0x8] sm:$0xff]
  %214 = vst [vmem:[#allocation1] ss:$2 sm:$0xff] %v210
  %s215 = scalar_lea.vmem [#allocation1], 16
  %216 = vst [vmem:[%s215] ss:$2 sm:$0xff] %v211
  %v217 = vld.sshfl [vmem:[#allocation1] sm:$0xff pattern:$0x75316420]
  %v218 = vld.sshfl [vmem:[#allocation1 + $0x8] sm:$0xff pattern:$0x75316420]
  %v219 = vld.sshfl [vmem:[#allocation1 + $0x10] sm:$0xff pattern:$0x75316420]
  %v220 = vld.sshfl [vmem:[#allocation1 + $0x18] sm:$0xff pattern:$0x75316420]
  %v225 = vadd.f32 %v206, %v217
  %v226 = vadd.f32 %v207, %v218
  %v227 = vadd.f32 %v208, %v219
  %v228 = vadd.f32 %v209, %v220
  %v229 = vld [vmem:[%s3] sm:$0x3]
  %v230 = vld [vmem:[%s2] sm:$0xff]
  %v231 = vld [vmem:[%s2 + $0x8] sm:$0xff]
  %234 = vst [vmem:[#allocation1] ss:$2 sm:$0xff] %v230
  %s235 = scalar_lea.vmem [#allocation1], 16
  %236 = vst [vmem:[%s235] ss:$2 sm:$0xff] %v231
  %v237 = vld.sshfl [vmem:[#allocation1] sm:$0xff pattern:$0x75316420]
  %v238 = vld.sshfl [vmem:[#allocation1 + $0x8] sm:$0xff pattern:$0x75316420]
  %v239 = vld.sshfl [vmem:[#allocation1 + $0x10] sm:$0xff pattern:$0x75316420]
  %v240 = vld.sshfl [vmem:[#allocation1 + $0x18] sm:$0xff pattern:$0x75316420]
  %vm241 = vcmask 31744
  %v243 = vsel %vm241, %v229, 0
  %v245 = vsel %vm145, %v237, 0
  %v247 = vsel %vm145, %v238, 0
  %v249 = vsel %vm145, %v239, 0
  %v251 = vsel %vm145, %v240, 0
  %253 = vmatpush.msra.mxu0 0.0
  %254 = vmatpush.msra.mxu0 0.0
  %255 = vmatpush.msra.mxu0 0.0
  %256 = vmatpush.msra.mxu0 0.0
  %257 = vmatpush.msra.mxu0 0.0
  %258 = vmatpush.msra.mxu0 0.0
  %259 = vmatpush.msra.mxu0 0.0
  %260 = vmatpush.msra.mxu0 0.0
  %261 = vmatpush.msra.mxu0 0.0
  %262 = vmatpush.msra.mxu0 0.0
  %263 = vmatpush.msra.mxu0 0.0
  %264 = vmatpush.msra.mxu0 0.0
  %265 = vmatpush.msra.mxu0 0.0
  %266 = vmatpush.msra.mxu0 0.0
  %267 = vmatpush.msra.mxu0 0.0
  %268 = vmatpush.msra.mxu0 %v245
  %269 = vmatmul.f32.gmra.mxu0 %v243
  %v270 = vpop.f32.mrf.mxu0
  %v271 = vadd.f32 0.0, %v270
  %272 = vdwg.mxu0
  %273 = vmatpush.msra.mxu0 0.0
  %274 = vmatpush.msra.mxu0 0.0
  %275 = vmatpush.msra.mxu0 0.0
  %276 = vmatpush.msra.mxu0 0.0
  %277 = vmatpush.msra.mxu0 0.0
  %278 = vmatpush.msra.mxu0 0.0
  %279 = vmatpush.msra.mxu0 0.0
  %280 = vmatpush.msra.mxu0 0.0
  %281 = vmatpush.msra.mxu0 0.0
  %282 = vmatpush.msra.mxu0 0.0
  %283 = vmatpush.msra.mxu0 0.0
  %284 = vmatpush.msra.mxu0 0.0
  %285 = vmatpush.msra.mxu0 0.0
  %286 = vmatpush.msra.mxu0 0.0
  %287 = vmatpush.msra.mxu0 0.0
  %288 = vmatpush.msra.mxu0 %v247
  %289 = vmatmul.f32.gmra.mxu0 %v243
  %v290 = vpop.f32.mrf.mxu0
  %v291 = vadd.f32 0.0, %v290
  %292 = vdwg.mxu0
  %293 = vmatpush.msra.mxu0 0.0
  %294 = vmatpush.msra.mxu0 0.0
  %295 = vmatpush.msra.mxu0 0.0
  %296 = vmatpush.msra.mxu0 0.0
  %297 = vmatpush.msra.mxu0 0.0
  %298 = vmatpush.msra.mxu0 0.0
  %299 = vmatpush.msra.mxu0 0.0
  %300 = vmatpush.msra.mxu0 0.0
  %301 = vmatpush.msra.mxu0 0.0
  %302 = vmatpush.msra.mxu0 0.0
  %303 = vmatpush.msra.mxu0 0.0
  %304 = vmatpush.msra.mxu0 0.0
  %305 = vmatpush.msra.mxu0 0.0
  %306 = vmatpush.msra.mxu0 0.0
  %307 = vmatpush.msra.mxu0 0.0
  %308 = vmatpush.msra.mxu0 %v249
  %309 = vmatmul.f32.gmra.mxu0 %v243
  %v310 = vpop.f32.mrf.mxu0
  %v311 = vadd.f32 0.0, %v310
  %312 = vdwg.mxu0
  %313 = vmatpush.msra.mxu0 0.0
  %314 = vmatpush.msra.mxu0 0.0
  %315 = vmatpush.msra.mxu0 0.0
  %316 = vmatpush.msra.mxu0 0.0
  %317 = vmatpush.msra.mxu0 0.0
  %318 = vmatpush.msra.mxu0 0.0
  %319 = vmatpush.msra.mxu0 0.0
  %320 = vmatpush.msra.mxu0 0.0
  %321 = vmatpush.msra.mxu0 0.0
  %322 = vmatpush.msra.mxu0 0.0
  %323 = vmatpush.msra.mxu0 0.0
  %324 = vmatpush.msra.mxu0 0.0
  %325 = vmatpush.msra.mxu0 0.0
  %326 = vmatpush.msra.mxu0 0.0
  %327 = vmatpush.msra.mxu0 0.0
  %328 = vmatpush.msra.mxu0 %v251
  %329 = vmatmul.f32.gmra.mxu0 %v243
  %v330 = vpop.f32.mrf.mxu0
  %v331 = vadd.f32 0.0, %v330
  %332 = vdwg.mxu0
  %vm333 = vcmask 1041408
  %v334 = vsel %vm333, %v271, 0.0
  %v335 = vsel %vm333, %v291, 0.0
  %v336 = vadd.f32 %v334, %v335
  %v337 = vsel %vm333, %v311, 0.0
  %v338 = vadd.f32 %v336, %v337
  %v339 = vsel %vm333, %v331, 0.0
  %v340 = vadd.f32 %v338, %v339
  %341 = vadd.xlane.f32.xlu0 %v340
  %v342 = vpop.xlane.xlu0 %341
  %v343 = vmul.f32 %v342, 0.001953125
  %v344 = vsub.f32 %v271, %v343
  %v345 = vsub.f32 %v291, %v343
  %v346 = vsub.f32 %v311, %v343
  %v347 = vsub.f32 %v331, %v343
  %v348 = vmul.f32 %v344, %v344
  %v349 = vmul.f32 %v345, %v345
  %v350 = vmul.f32 %v346, %v346
  %v351 = vmul.f32 %v347, %v347
  %v352 = vsel %vm333, %v348, 0.0
  %v353 = vsel %vm333, %v349, 0.0
  %v354 = vadd.f32 %v352, %v353
  %v355 = vsel %vm333, %v350, 0.0
  %v356 = vadd.f32 %v354, %v355
  %v357 = vsel %vm333, %v351, 0.0
  %v358 = vadd.f32 %v356, %v357
  %359 = vadd.xlane.f32.xlu0 %v358
  %v360 = vpop.xlane.xlu0 %359
  %v361 = vmul.f32 %v360, 0.001953125
  %v362 = vadd.f32 %v361, 1e-05
  %v363 = vrsqrt.pop %v362
  %v364 = vmul.f32 %v363, %v362
  %v365 = vmul.f32 %v364, %v363
  %v366 = vmul.f32 0.5, %v365
  %v367 = vsub.f32 1.5, %v366
  %v368 = vmul.f32 %v363, %v367
  %vm369 = vweird.f32 %v362
  %vm370 = vweird.f32 %v363
  %vm371 = vmor %vm369, %vm370
  %v372 = vsel %vm371, %v363, %v368
  %v373 = vmul.f32 %v344, %v372
  %v374 = vmul.f32 %v345, %v372
  %v375 = vmul.f32 %v346, %v372
  %v376 = vmul.f32 %v347, %v372
  %v377 = vrot.slane %v192, 4
  %v379 = vmul.f32 %v373, %v377
  %v380 = vmul.f32 %v374, %v377
  %v381 = vmul.f32 %v375, %v377
  %v382 = vmul.f32 %v376, %v377
  %v383 = vrot.slane %v200, 4
  %v385 = vadd.f32 %v379, %v383
  %v386 = vadd.f32 %v380, %v383
  %v387 = vadd.f32 %v381, %v383
  %v388 = vadd.f32 %v382, %v383
  %v389 = vmax.f32 %v385, 0.0
  %v390 = vmax.f32 %v386, 0.0
  %v391 = vmax.f32 %v387, 0.0
  %v392 = vmax.f32 %v388, 0.0
  %393 = vst [vmem:[%s6] sm:$0xf] %v225
  %394 = vst [vmem:[%s6 + $0x8] sm:$0xf] %v226
  %395 = vst [vmem:[%s6 + $0x10] sm:$0xf] %v227
  %396 = vst [vmem:[%s6 + $0x18] sm:$0xf] %v228
  %397 = vst [vmem:[%s6] sm:$0xf0] %v83
  %398 = vst [vmem:[%s6 + $0x8] sm:$0xf0] %v103
  %399 = vst [vmem:[%s6 + $0x10] sm:$0xf0] %v123
  %400 = vst [vmem:[%s6 + $0x18] sm:$0xf0] %v143
  %401 = vst [vmem:[%s6 + $0x20] sm:$0x3] %v389
  %402 = vst [vmem:[%s6 + $0x28] sm:$0x3] %v390
  %403 = vst [vmem:[%s6 + $0x30] sm:$0x3] %v391
  %404 = vst [vmem:[%s6 + $0x38] sm:$0x3] %v392
  // Predicated region
  $region26: #{ffc_resnet_block.6} parent=0 // pred_check
    _
  $region27: #{ffc_resnet_block.6} parent=0 // pred_check_branch
    %406 = sbr.rel (0) target = $region29
  $region28: #{ffc_resnet_block.6} parent=0 // pred_region
    _
  $region29: #{ffc_resnet_block.6} parent=0 // pred_fallthru
    _
  // Predicated region
  $region30: #{ffc_resnet_block.6} parent=0 // pred_check
    _
  $region31: #{ffc_resnet_block.6} parent=0 // pred_check_branch
    %408 = sbr.rel (0) target = $region33
  $region32: #{ffc_resnet_block.6} parent=0 // pred_region
    _
  $region33: #{ffc_resnet_block.6} parent=0 // pred_fallthru
    _

// kernel: ffc_resnet_block.7
$region0: #{ffc_resnet_block.7}
  #allocation0 [shape = 'u32[]', space=smem, size = 0x4, offset = 0x4, fixed_abs, tag = 'smem constant byte address 0x4 - core index']
  #allocation1 [shape = 'u32[72,128]{1,0:T(1,128)}', space=vmem, size = 0x9000, scoped, tag = 'internal scratch']
  %s0 = inlined_call_operand.vmem [shape: f32[6,512], index: 0, kind: input, shape index: {}]
  %s1 = inlined_call_operand.vmem [shape: f32[4,2], index: 1, kind: input, shape index: {}]
  %s2 = inlined_call_operand.vmem [shape: f32[4,2], index: 2, kind: input, shape index: {}]
  %s3 = inlined_call_operand.vmem [shape: f32[4,512], index: 3, kind: input, shape index: {}]
  %s4 = inlined_call_operand.vmem [shape: f32[4,512], index: 4, kind: output, shape index: {}]
  %s5 = sld [smem:[#allocation0]]
  $region26: #{ffc_resnet_block.7} parent=0
    _
  %s7 = ssub.s32 1, %s5
  %s8 = scalar_select 0, %s7, %s5
  // Predicated region
  $region2: #{ffc_resnet_block.7} parent=0 // pred_check
    _
  $region3: #{ffc_resnet_block.7} parent=0 // pred_check_branch
    %10 = sbr.rel (0) target = $region5
  $region4: #{ffc_resnet_block.7} parent=0 // pred_region
    _
  $region5: #{ffc_resnet_block.7} parent=0 // pred_fallthru
    _
  // Predicated region
  $region6: #{ffc_resnet_block.7} parent=0 // pred_check
    _
  $region7: #{ffc_resnet_block.7} parent=0 // pred_check_branch
    %12 = sbr.rel (0) target = $region9
  $region8: #{ffc_resnet_block.7} parent=0 // pred_region
    _
  $region9: #{ffc_resnet_block.7} parent=0 // pred_fallthru
    _
  // Predicated region
  $region10: #{ffc_resnet_block.7} parent=0 // pred_check
    _
  $region11: #{ffc_resnet_block.7} parent=0 // pred_check_branch
    %14 = sbr.rel (0) target = $region13
  $region12: #{ffc_resnet_block.7} parent=0 // pred_region
    _
  $region13: #{ffc_resnet_block.7} parent=0 // pred_fallthru
    _
  // Predicated region
  $region14: #{ffc_resnet_block.7} parent=0 // pred_check
    _
  $region15: #{ffc_resnet_block.7} parent=0 // pred_check_branch
    %16 = sbr.rel (0) target = $region17
  $region16: #{ffc_resnet_block.7} parent=0 // pred_region
    _
  $region17: #{ffc_resnet_block.7} parent=0 // pred_fallthru
    _
  %v17 = vld [vmem:[%s0] sm:$0x3f]
  %v18 = vld [vmem:[%s0 + $0x8] sm:$0x3f]
  %v19 = vld [vmem:[%s0 + $0x10] sm:$0x3f]
  %v20 = vld [vmem:[%s0 + $0x18] sm:$0x3f]
  %v21 = vld [vmem:[%s1] sm:$0xf]
  %v26 = vrot.slane %v17, 4
  %v27 = vrot.slane %v18, 4
  %v28 = vrot.slane %v19, 4
  %v29 = vrot.slane %v20, 4
  %vm30 = vcmask 15360
  %v32 = vsel %vm30, %v21, 0
  %vm34 = vcmask 1041408
  %v35 = vsel %vm34, %v26, 0
  %v37 = vsel %vm34, %v27, 0
  %v39 = vsel %vm34, %v28, 0
  %v41 = vsel %vm34, %v29, 0
  %43 = vmatpush.msra.mxu0 0.0
  %44 = vmatpush.msra.mxu0 0.0
  %45 = vmatpush.msra.mxu0 0.0
  %46 = vmatpush.msra.mxu0 0.0
  %47 = vmatpush.msra.mxu0 0.0
  %48 = vmatpush.msra.mxu0 0.0
  %49 = vmatpush.msra.mxu0 0.0
  %50 = vmatpush.msra.mxu0 0.0
  %51 = vmatpush.msra.mxu0 0.0
  %52 = vmatpush.msra.mxu0 0.0
  %53 = vmatpush.msra.mxu0 0.0
  %54 = vmatpush.msra.mxu0 0.0
  %55 = vmatpush.msra.mxu0 0.0
  %56 = vmatpush.msra.mxu0 0.0
  %57 = vmatpush.msra.mxu0 0.0
  %58 = vmatpush.msra.mxu0 %v35
  %59 = vmatmul.f32.gmra.mxu0 %v32
  %v60 = vpop.f32.mrf.mxu0
  %v61 = vadd.f32 0.0, %v60
  %62 = vdwg.mxu0
  %63 = vmatpush.msra.mxu0 0.0
  %64 = vmatpush.msra.mxu0 0.0
  %65 = vmatpush.msra.mxu0 0.0
  %66 = vmatpush.msra.mxu0 0.0
  %67 = vmatpush.msra.mxu0 0.0
  %68 = vmatpush.msra.mxu0 0.0
  %69 = vmatpush.msra.mxu0 0.0
  %70 = vmatpush.msra.mxu0 0.0
  %71 = vmatpush.msra.mxu0 0.0
  %72 = vmatpush.msra.mxu0 0.0
  %73 = vmatpush.msra.mxu0 0.0
  %74 = vmatpush.msra.mxu0 0.0
  %75 = vmatpush.msra.mxu0 0.0
  %76 = vmatpush.msra.mxu0 0.0
  %77 = vmatpush.msra.mxu0 0.0
  %78 = vmatpush.msra.mxu0 %v37
  %79 = vmatmul.f32.gmra.mxu0 %v32
  %v80 = vpop.f32.mrf.mxu0
  %v81 = vadd.f32 0.0, %v80
  %82 = vdwg.mxu0
  %83 = vmatpush.msra.mxu0 0.0
  %84 = vmatpush.msra.mxu0 0.0
  %85 = vmatpush.msra.mxu0 0.0
  %86 = vmatpush.msra.mxu0 0.0
  %87 = vmatpush.msra.mxu0 0.0
  %88 = vmatpush.msra.mxu0 0.0
  %89 = vmatpush.msra.mxu0 0.0
  %90 = vmatpush.msra.mxu0 0.0
  %91 = vmatpush.msra.mxu0 0.0
  %92 = vmatpush.msra.mxu0 0.0
  %93 = vmatpush.msra.mxu0 0.0
  %94 = vmatpush.msra.mxu0 0.0
  %95 = vmatpush.msra.mxu0 0.0
  %96 = vmatpush.msra.mxu0 0.0
  %97 = vmatpush.msra.mxu0 0.0
  %98 = vmatpush.msra.mxu0 %v39
  %99 = vmatmul.f32.gmra.mxu0 %v32
  %v100 = vpop.f32.mrf.mxu0
  %v101 = vadd.f32 0.0, %v100
  %102 = vdwg.mxu0
  %103 = vmatpush.msra.mxu0 0.0
  %104 = vmatpush.msra.mxu0 0.0
  %105 = vmatpush.msra.mxu0 0.0
  %106 = vmatpush.msra.mxu0 0.0
  %107 = vmatpush.msra.mxu0 0.0
  %108 = vmatpush.msra.mxu0 0.0
  %109 = vmatpush.msra.mxu0 0.0
  %110 = vmatpush.msra.mxu0 0.0
  %111 = vmatpush.msra.mxu0 0.0
  %112 = vmatpush.msra.mxu0 0.0
  %113 = vmatpush.msra.mxu0 0.0
  %114 = vmatpush.msra.mxu0 0.0
  %115 = vmatpush.msra.mxu0 0.0
  %116 = vmatpush.msra.mxu0 0.0
  %117 = vmatpush.msra.mxu0 0.0
  %118 = vmatpush.msra.mxu0 %v41
  %119 = vmatmul.f32.gmra.mxu0 %v32
  %v120 = vpop.f32.mrf.mxu0
  %v121 = vadd.f32 0.0, %v120
  %122 = vdwg.mxu0
  %v123 = vld [vmem:[%s2] sm:$0xf]
  %v124 = vadd.f32 %v17, %v61
  %v125 = vadd.f32 %v18, %v81
  %v126 = vadd.f32 %v19, %v101
  %v127 = vadd.f32 %v20, %v121
  %vm128 = vcmask 1043456
  %v129 = vsel %vm128, %v124, 0.0
  %v130 = vsel %vm128, %v125, 0.0
  %v131 = vadd.f32 %v129, %v130
  %v132 = vsel %vm128, %v126, 0.0
  %v133 = vadd.f32 %v131, %v132
  %v134 = vsel %vm128, %v127, 0.0
  %v135 = vadd.f32 %v133, %v134
  %136 = vadd.xlane.f32.xlu0 %v135
  %v137 = vpop.xlane.xlu0 %136
  %v138 = vmul.f32 %v137, 0.001953125
  %v139 = vsub.f32 %v124, %v138
  %v140 = vsub.f32 %v125, %v138
  %v141 = vsub.f32 %v126, %v138
  %v142 = vsub.f32 %v127, %v138
  %v143 = vmul.f32 %v139, %v139
  %v144 = vmul.f32 %v140, %v140
  %v145 = vmul.f32 %v141, %v141
  %v146 = vmul.f32 %v142, %v142
  %v147 = vsel %vm128, %v143, 0.0
  %v148 = vsel %vm128, %v144, 0.0
  %v149 = vadd.f32 %v147, %v148
  %v150 = vsel %vm128, %v145, 0.0
  %v151 = vadd.f32 %v149, %v150
  %v152 = vsel %vm128, %v146, 0.0
  %v153 = vadd.f32 %v151, %v152
  %154 = vadd.xlane.f32.xlu0 %v153
  %v155 = vpop.xlane.xlu0 %154
  %v156 = vmul.f32 %v155, 0.001953125
  %v157 = vadd.f32 %v156, 1e-05
  %v158 = vrsqrt.pop %v157
  %v159 = vmul.f32 %v158, %v157
  %v160 = vmul.f32 %v159, %v158
  %v161 = vmul.f32 0.5, %v160
  %v162 = vsub.f32 1.5, %v161
  %v163 = vmul.f32 %v158, %v162
  %vm164 = vweird.f32 %v157
  %vm165 = vweird.f32 %v158
  %vm166 = vmor %vm164, %vm165
  %v167 = vsel %vm166, %v158, %v163
  %v168 = vmul.f32 %v139, %v167
  %v169 = vmul.f32 %v140, %v167
  %v170 = vmul.f32 %v141, %v167
  %v171 = vmul.f32 %v142, %v167
  %173 = vset.pattern.permute.xlu0 0
  %174 = vperm.xlu0 %173, %v123
  %v175 = vpop.permute.xlu0 %174
  %v177 = vmul.f32 %v168, %v175
  %v178 = vmul.f32 %v169, %v175
  %v179 = vmul.f32 %v170, %v175
  %v180 = vmul.f32 %v171, %v175
  %181 = vset.pattern.permute.xlu0 1
  %182 = vperm.xlu0 %181, %v123
  %v183 = vpop.permute.xlu0 %182
  %v185 = vadd.f32 %v177, %v183
  %v186 = vadd.f32 %v178, %v183
  %v187 = vadd.f32 %v179, %v183
  %v188 = vadd.f32 %v180, %v183
  %v189 = vmax.f32 %v185, 0.0
  %v190 = vmax.f32 %v186, 0.0
  %v191 = vmax.f32 %v187, 0.0
  %v192 = vmax.f32 %v188, 0.0
  %v193 = vld [vmem:[%s3] sm:$0xff]
  %v194 = vld [vmem:[%s3 + $0x8] sm:$0xff]
  %197 = vst [vmem:[#allocation1] ss:$2 sm:$0xff] %v193
  %s198 = scalar_lea.vmem [#allocation1], 16
  %199 = vst [vmem:[%s198] ss:$2 sm:$0xff] %v194
  %v200 = vld.sshfl [vmem:[#allocation1] sm:$0xff pattern:$0x75316420]
  %v201 = vld.sshfl [vmem:[#allocation1 + $0x8] sm:$0xff pattern:$0x75316420]
  %v202 = vld.sshfl [vmem:[#allocation1 + $0x10] sm:$0xff pattern:$0x75316420]
  %v203 = vld.sshfl [vmem:[#allocation1 + $0x18] sm:$0xff pattern:$0x75316420]
  %v208 = vadd.f32 %v189, %v200
  %v209 = vadd.f32 %v190, %v201
  %v210 = vadd.f32 %v191, %v202
  %v211 = vadd.f32 %v192, %v203
  %v216 = vrot.slane %v209, 4
  %v217 = vrot.slane %v211, 4
  %v218 = vsel %vm128, %v208, %v216
  %v219 = vsel %vm128, %v210, %v217
  %222 = vst [vmem:[%s4] sm:$0xff] %v218
  %223 = vst [vmem:[%s4 + $0x8] sm:$0xff] %v219
  // Predicated region
  $region18: #{ffc_resnet_block.7} parent=0 // pred_check
    _
  $region19: #{ffc_resnet_block.7} parent=0 // pred_check_branch
    %225 = sbr.rel (0) target = $region21
  $region20: #{ffc_resnet_block.7} parent=0 // pred_region
    _
  $region21: #{ffc_resnet_block.7} parent=0 // pred_fallthru
    _
  // Predicated region
  $region22: #{ffc_resnet_block.7} parent=0 // pred_check
    _
  $region23: #{ffc_resnet_block.7} parent=0 // pred_check_branch
    %227 = sbr.rel (0) target = $region25
  $region24: #{ffc_resnet_block.7} parent=0 // pred_region
    _
  $region25: #{ffc_resnet_block.7} parent=0 // pred_fallthru
    _

</llo_original>
